<compile_context>
chip_gen: v7x
topology: tpu7x:2x2x1
jax: 0.10.0
libtpu: 0.0.40
codegen_flags: <defaults>
</compile_context>

<pallas_src>
import functools

import jax
import jax.numpy as jnp
from jax.experimental import pallas as pl
from jax.experimental.pallas import tpu as pltpu


def _encoder_kernel(x_ref, w_ref, vec_ref, o_ref, *, num_heads):
    B, C, L = x_ref.shape
    H = num_heads
    D = C // H
    BL = B * L
    scale = 1.0 / (D ** 0.5)
    eps = 1e-5

    # ---- fused input relayout: (B, C, L) -> lane-dense (C, B*L) ----------
    # Static per-batch loads + a lane concat (B is small/static), so the
    # wrapper no longer needs its own transpose XLA ops around the kernel.
    X = jnp.concatenate([x_ref[b] for b in range(B)], axis=1)        # (C, BL)

    # ---- packed parameters ------------------------------------------------
    # One (3C, C) weight slab: rows [0,C)=wqk, [C,2C)=wv, [2C,3C)=wlin.
    W = w_ref[...]
    # One (C, 8) per-channel slab: cols = bv, blin, g1, b1, g2, b2, pad, pad.
    V = vec_ref[...]
    bv, blin = V[:, 0:1], V[:, 1:2]
    g1, b1 = V[:, 2:3], V[:, 3:4]
    g2, b2 = V[:, 4:5], V[:, 5:6]

    # ---- projections: one fused (2C, C) @ (C, BL) MXU pass (q == k) -------
    qkv = jnp.dot(W[:2 * C, :], X, preferred_element_type=jnp.float32)  # (2C, BL)
    qk = qkv[:C, :]
    vv = qkv[C:, :] + bv

    qk3 = qk.reshape(H, D, BL)                                        # (H, D, BL)
    v3 = vv.reshape(H, D, BL)

    # ---- attention: batched over heads, static loop over batch ------------
    # No block-diagonal mask / iota / int-div; per-batch (H, L, L) scores.
    # TODO(synk): when scaling B/L, move batch to a "parallel" grid axis (two
    #             TCs on v7x) and flash-tile the key dimension so the L^2
    #             intermediates fit v7x's 64 MiB VMEM; bf16 MXU operands only
    #             become worthwhile at those sizes as well.
    outs = []
    for b in range(B):
        qb = qk3[:, :, b * L:(b + 1) * L]                             # (H, D, L)
        vb = v3[:, :, b * L:(b + 1) * L]                              # (H, D, L)
        qbt = jnp.transpose(qb, (0, 2, 1))                            # (H, L, D)
        s = jnp.einsum('hid,hjd->hij', qbt, qbt,
                       preferred_element_type=jnp.float32) * scale    # (H, L, L)
        m = jnp.max(s, axis=-1, keepdims=True)
        p = jnp.exp(s - m)
        # Approximate reciprocal runs on the EUP slot; covered by the 5e-3
        # tolerance (denominator is only (H, L, 1)).
        p = p * pl.reciprocal(jnp.sum(p, axis=-1, keepdims=True), approx=True)
        outs.append(jnp.einsum('hdj,hij->hdi', vb, p,
                               preferred_element_type=jnp.float32))   # (H, D, L)
    out = jnp.concatenate(outs, axis=-1)                              # (H, D, BL)

    # torch.cat(x.unbind(3), dim=2): merged channel index c = d*H + h.
    merged = jnp.transpose(out, (1, 0, 2)).reshape(C, BL)

    X1 = X + merged                                                   # residual

    def bn(z, g, b):
        # BatchNorm1d (training mode): per-channel stats over all B*L columns.
        mu = jnp.mean(z, axis=1, keepdims=True)
        var = jnp.mean((z - mu) ** 2, axis=1, keepdims=True)
        return (z - mu) * jax.lax.rsqrt(var + eps) * g + b

    X2 = bn(X1, g1, b1)                                               # bn_after_sa
    lin = jnp.dot(W[2 * C:, :], X2,
                  preferred_element_type=jnp.float32) + blin          # linear_after_sa
    X3 = X2 + lin                                                     # residual
    Y = bn(X3, g2, b2)                                                # bn_after_linear_sa

    # ---- fused output relayout: (C, B*L) -> (B, C, L) per-batch stores ----
    for b in range(B):
        o_ref[b, :, :] = Y[:, b * L:(b + 1) * L].astype(o_ref.dtype)


def encoder_forward(x, params, num_heads):
    B, C, L = x.shape
    assert C % num_heads == 0
    # Pack weights / per-channel vectors into 2 slabs so the kernel sees 3
    # inputs (3 DMAs) instead of 10.  In a real model this packing is done
    # once at init time, not per call.
    w_all = jnp.concatenate(
        [params['wqk'], params['wv'], params['wlin']], axis=0)        # (3C, C)
    zero = jnp.zeros_like(params['bv'])
    vecs = jnp.stack([params['bv'], params['blin'],
                      params['g1'], params['b1'],
                      params['g2'], params['b2'], zero, zero], axis=1)  # (C, 8)

    kernel = functools.partial(_encoder_kernel, num_heads=num_heads)
    vmem = pl.BlockSpec(memory_space=pltpu.MemorySpace.VMEM)
    # NOTE: BatchNorm needs statistics over the full (B, L) extent, so at
    # these tiny sizes a single grid-less program is used.  Scaling requires
    # a grid axis over B/heads (marked "parallel" for v7x's 2 TCs) plus a
    # two-pass / accumulator BN, with tiles sized against v7x's 64 MiB VMEM
    # and the (C, lanes) store kept a multiple of 128 lanes.
    return pl.pallas_call(
        kernel,
        out_shape=jax.ShapeDtypeStruct((B, C, L), x.dtype),
        in_specs=[vmem, vmem, vmem],
        out_specs=vmem,
        compiler_params=pltpu.CompilerParams(vmem_limit_bytes=32 * 1024 * 1024),
    )(x, w_all, vecs)


def encoder_reference(x, params, num_heads):
    """Pure-JAX reference of EncoderModule.forward (for verification)."""
    B, C, L = x.shape
    D = C // num_heads
    q = jnp.einsum('oc,bcl->blo', params['wqk'], x)           # (B, L, C)
    k = q                                                     # tied weights
    v = jnp.einsum('oc,bcl->blo', params['wv'], x) + params['bv'][None, None, :]
    qh = q.reshape(B, L, num_heads, D)
    kh = k.reshape(B, L, num_heads, D)
    vh = v.reshape(B, L, num_heads, D)
    s = jnp.einsum('blhd,bmhd->bhlm', qh, kh) / jnp.sqrt(D)
    p = jax.nn.softmax(s, axis=-1)
    o = jnp.einsum('bhlm,bmhd->blhd', p, vh)                  # (B, L, H, D)
    merged = jnp.transpose(o, (0, 1, 3, 2)).reshape(B, L, C)  # c = d*H + h
    x1 = x + jnp.transpose(merged, (0, 2, 1))

    def bn(z, g, bta):
        mu = jnp.mean(z, axis=(0, 2), keepdims=True)
        var = jnp.mean((z - mu) ** 2, axis=(0, 2), keepdims=True)
        return (z - mu) / jnp.sqrt(var + 1e-5) * g[None, :, None] + bta[None, :, None]

    x2 = bn(x1, params['g1'], params['b1'])
    xt = jnp.transpose(x2, (0, 2, 1))
    lin = jnp.einsum('blc,oc->blo', xt, params['wlin']) + params['blin'][None, None, :]
    x3 = jnp.transpose(xt + lin, (0, 2, 1))
    return bn(x3, params['g2'], params['b2'])


if __name__ == "__main__":
    B, C, L, H = 2, 32, 16, 4          # in_features=32, num_heads=4, head_dim=8

    key = jax.random.PRNGKey(0)
    ks = jax.random.split(key, 10)
    params = dict(
        wqk=0.1 * jax.random.normal(ks[0], (C, C), jnp.float32),
        wv=0.1 * jax.random.normal(ks[1], (C, C), jnp.float32),
        bv=0.1 * jax.random.normal(ks[2], (C,), jnp.float32),
        wlin=0.1 * jax.random.normal(ks[3], (C, C), jnp.float32),
        blin=0.1 * jax.random.normal(ks[4], (C,), jnp.float32),
        g1=1.0 + 0.1 * jax.random.normal(ks[5], (C,), jnp.float32),
        b1=0.1 * jax.random.normal(ks[6], (C,), jnp.float32),
        g2=1.0 + 0.1 * jax.random.normal(ks[7], (C,), jnp.float32),
        b2=0.1 * jax.random.normal(ks[8], (C,), jnp.float32),
    )
    x = jax.random.normal(ks[9], (B, C, L), jnp.float32)

    out = encoder_forward(x, params, num_heads=H)
    out = jax.block_until_ready(out)

    ref = encoder_reference(x, params, num_heads=H)
    err = float(jnp.max(jnp.abs(out - ref)))
    assert out.shape == (B, C, L)
    # All matmul/BN math stays f32; the remaining slack covers the approximate
    # EUP reciprocal used for softmax normalization.  Layout/permutation bugs
    # would produce O(1) errors.
    assert err < 5e-3, f"max abs err {err}"
    print("KERNEL_OK")
</pallas_src>

<mosaic_0001>
module attributes {stable_mosaic.version = 11 : i64} {
  func.func @_encoder_kernel(%arg0: memref<2x32x16xf32, #tpu.memory_space<vmem>>, %arg1: memref<96x32xf32, #tpu.memory_space<vmem>>, %arg2: memref<32x8xf32, #tpu.memory_space<vmem>>, %arg3: memref<2x32x16xf32, #tpu.memory_space<vmem>>) attributes {dimension_semantics = [], scalar_prefetch = 0 : i64, scratch_operands = 0 : i64, tpu.core_type = #tpu.core_type<tc>} {
    %c0 = arith.constant 0 : index
    %c0_0 = arith.constant 0 : index
    %c0_1 = arith.constant 0 : index
    %0 = vector.load %arg0[%c0, %c0_0, %c0_1] : memref<2x32x16xf32, #tpu.memory_space<vmem>>, vector<1x32x16xf32>
    %1 = vector.shape_cast %0 : vector<1x32x16xf32> to vector<32x16xf32>
    %c1 = arith.constant 1 : index
    %c0_2 = arith.constant 0 : index
    %c0_3 = arith.constant 0 : index
    %2 = vector.load %arg0[%c1, %c0_2, %c0_3] : memref<2x32x16xf32, #tpu.memory_space<vmem>>, vector<1x32x16xf32>
    %3 = vector.shape_cast %2 : vector<1x32x16xf32> to vector<32x16xf32>
    %4 = tpu.concatenate %1, %3 in 1 : vector<32x16xf32>, vector<32x16xf32> -> vector<32x32xf32>
    %c0_4 = arith.constant 0 : index
    %c0_5 = arith.constant 0 : index
    %5 = vector.load %arg1[%c0_4, %c0_5] : memref<96x32xf32, #tpu.memory_space<vmem>>, vector<96x32xf32>
    %c0_6 = arith.constant 0 : index
    %c0_7 = arith.constant 0 : index
    %6 = vector.load %arg2[%c0_6, %c0_7] : memref<32x8xf32, #tpu.memory_space<vmem>>, vector<32x8xf32>
    %7 = vector.extract_strided_slice %6 {offsets = [0, 0], sizes = [32, 1], strides = [1, 1]} : vector<32x8xf32> to vector<32x1xf32>
    %8 = vector.extract_strided_slice %6 {offsets = [0, 1], sizes = [32, 1], strides = [1, 1]} : vector<32x8xf32> to vector<32x1xf32>
    %9 = vector.extract_strided_slice %6 {offsets = [0, 2], sizes = [32, 1], strides = [1, 1]} : vector<32x8xf32> to vector<32x1xf32>
    %10 = vector.extract_strided_slice %6 {offsets = [0, 3], sizes = [32, 1], strides = [1, 1]} : vector<32x8xf32> to vector<32x1xf32>
    %11 = vector.extract_strided_slice %6 {offsets = [0, 4], sizes = [32, 1], strides = [1, 1]} : vector<32x8xf32> to vector<32x1xf32>
    %12 = vector.extract_strided_slice %6 {offsets = [0, 5], sizes = [32, 1], strides = [1, 1]} : vector<32x8xf32> to vector<32x1xf32>
    %13 = vector.extract_strided_slice %5 {offsets = [0, 0], sizes = [64, 32], strides = [1, 1]} : vector<96x32xf32> to vector<64x32xf32>
    %cst = arith.constant dense<0.000000e+00> : vector<64x32xf32>
    %14 = tpu.matmul %13, %4, %cst {dimension_numbers = #tpu.dot_dimension_numbers<[1], [0], [0], [1], [0, 0, 1, 1], [], []>} : vector<64x32xf32>, vector<32x32xf32>, vector<64x32xf32> -> vector<64x32xf32>
    %15 = vector.extract_strided_slice %14 {offsets = [0, 0], sizes = [32, 32], strides = [1, 1]} : vector<64x32xf32> to vector<32x32xf32>
    %16 = vector.extract_strided_slice %14 {offsets = [32, 0], sizes = [32, 32], strides = [1, 1]} : vector<64x32xf32> to vector<32x32xf32>
    %17 = vector.broadcast %7 : vector<32x1xf32> to vector<32x32xf32>
    %18 = arith.addf %16, %17 : vector<32x32xf32>
    %19 = vector.shape_cast %15 : vector<32x32xf32> to vector<4x8x32xf32>
    %20 = vector.shape_cast %18 : vector<32x32xf32> to vector<4x8x32xf32>
    %21 = vector.extract_strided_slice %19 {offsets = [0, 0, 0], sizes = [4, 8, 16], strides = [1, 1, 1]} : vector<4x8x32xf32> to vector<4x8x16xf32>
    %22 = vector.extract_strided_slice %20 {offsets = [0, 0, 0], sizes = [4, 8, 16], strides = [1, 1, 1]} : vector<4x8x32xf32> to vector<4x8x16xf32>
    %23 = tpu.transpose %21, [0, 2, 1] : vector<4x8x16xf32> -> vector<4x16x8xf32>
    "tpu.trace_start"() <{level = 10 : i32, message = "hid,hjd->hij"}> : () -> ()
    %cst_8 = arith.constant dense<0.000000e+00> : vector<4x16x16xf32>
    %24 = tpu.matmul %23, %23, %cst_8 {dimension_numbers = #tpu.dot_dimension_numbers<[2], [2], [1], [1], [0, 0, 0, 1, 1, 1], [0], [0]>} : vector<4x16x8xf32>, vector<4x16x8xf32>, vector<4x16x16xf32> -> vector<4x16x16xf32>
    "tpu.trace_stop"() : () -> ()
    %cst_9 = arith.constant 0.353553385 : f32
    %25 = vector.broadcast %cst_9 : f32 to vector<4x16x16xf32>
    %26 = arith.mulf %24, %25 : vector<4x16x16xf32>
    %cst_10 = arith.constant dense<0xFF800000> : vector<4x16xf32>
    %27 = vector.multi_reduction <maximumf>, %26, %cst_10 [2] : vector<4x16x16xf32> to vector<4x16xf32>
    %28 = vector.shape_cast %27 : vector<4x16xf32> to vector<4x16x1xf32>
    %29 = vector.broadcast %28 : vector<4x16x1xf32> to vector<4x16x16xf32>
    %30 = arith.subf %26, %29 : vector<4x16x16xf32>
    %31 = math.exp %30 : vector<4x16x16xf32>
    %cst_11 = arith.constant dense<0.000000e+00> : vector<4x16xf32>
    %32 = vector.multi_reduction <add>, %31, %cst_11 [2] : vector<4x16x16xf32> to vector<4x16xf32>
    %33 = vector.shape_cast %32 : vector<4x16xf32> to vector<4x16x1xf32>
    %34 = tpu.reciprocal %33 {approx = true} : vector<4x16x1xf32> -> vector<4x16x1xf32>
    %35 = vector.broadcast %34 : vector<4x16x1xf32> to vector<4x16x16xf32>
    %36 = arith.mulf %31, %35 : vector<4x16x16xf32>
    "tpu.trace_start"() <{level = 10 : i32, message = "hdj,hij->hdi"}> : () -> ()
    %cst_12 = arith.constant dense<0.000000e+00> : vector<4x8x16xf32>
    %37 = tpu.matmul %22, %36, %cst_12 {dimension_numbers = #tpu.dot_dimension_numbers<[2], [2], [1], [1], [0, 0, 0, 1, 1, 1], [0], [0]>} : vector<4x8x16xf32>, vector<4x16x16xf32>, vector<4x8x16xf32> -> vector<4x8x16xf32>
    "tpu.trace_stop"() : () -> ()
    %38 = vector.extract_strided_slice %19 {offsets = [0, 0, 16], sizes = [4, 8, 16], strides = [1, 1, 1]} : vector<4x8x32xf32> to vector<4x8x16xf32>
    %39 = vector.extract_strided_slice %20 {offsets = [0, 0, 16], sizes = [4, 8, 16], strides = [1, 1, 1]} : vector<4x8x32xf32> to vector<4x8x16xf32>
    %40 = tpu.transpose %38, [0, 2, 1] : vector<4x8x16xf32> -> vector<4x16x8xf32>
    "tpu.trace_start"() <{level = 10 : i32, message = "hid,hjd->hij"}> : () -> ()
    %cst_13 = arith.constant dense<0.000000e+00> : vector<4x16x16xf32>
    %41 = tpu.matmul %40, %40, %cst_13 {dimension_numbers = #tpu.dot_dimension_numbers<[2], [2], [1], [1], [0, 0, 0, 1, 1, 1], [0], [0]>} : vector<4x16x8xf32>, vector<4x16x8xf32>, vector<4x16x16xf32> -> vector<4x16x16xf32>
    "tpu.trace_stop"() : () -> ()
    %cst_14 = arith.constant 0.353553385 : f32
    %42 = vector.broadcast %cst_14 : f32 to vector<4x16x16xf32>
    %43 = arith.mulf %41, %42 : vector<4x16x16xf32>
    %cst_15 = arith.constant dense<0xFF800000> : vector<4x16xf32>
    %44 = vector.multi_reduction <maximumf>, %43, %cst_15 [2] : vector<4x16x16xf32> to vector<4x16xf32>
    %45 = vector.shape_cast %44 : vector<4x16xf32> to vector<4x16x1xf32>
    %46 = vector.broadcast %45 : vector<4x16x1xf32> to vector<4x16x16xf32>
    %47 = arith.subf %43, %46 : vector<4x16x16xf32>
    %48 = math.exp %47 : vector<4x16x16xf32>
    %cst_16 = arith.constant dense<0.000000e+00> : vector<4x16xf32>
    %49 = vector.multi_reduction <add>, %48, %cst_16 [2] : vector<4x16x16xf32> to vector<4x16xf32>
    %50 = vector.shape_cast %49 : vector<4x16xf32> to vector<4x16x1xf32>
    %51 = tpu.reciprocal %50 {approx = true} : vector<4x16x1xf32> -> vector<4x16x1xf32>
    %52 = vector.broadcast %51 : vector<4x16x1xf32> to vector<4x16x16xf32>
    %53 = arith.mulf %48, %52 : vector<4x16x16xf32>
    "tpu.trace_start"() <{level = 10 : i32, message = "hdj,hij->hdi"}> : () -> ()
    %cst_17 = arith.constant dense<0.000000e+00> : vector<4x8x16xf32>
    %54 = tpu.matmul %39, %53, %cst_17 {dimension_numbers = #tpu.dot_dimension_numbers<[2], [2], [1], [1], [0, 0, 0, 1, 1, 1], [0], [0]>} : vector<4x8x16xf32>, vector<4x16x16xf32>, vector<4x8x16xf32> -> vector<4x8x16xf32>
    "tpu.trace_stop"() : () -> ()
    %55 = tpu.concatenate %37, %54 in 2 : vector<4x8x16xf32>, vector<4x8x16xf32> -> vector<4x8x32xf32>
    %56 = tpu.transpose %55, [1, 0, 2] : vector<4x8x32xf32> -> vector<8x4x32xf32>
    %57 = vector.shape_cast %56 : vector<8x4x32xf32> to vector<32x32xf32>
    %58 = arith.addf %4, %57 : vector<32x32xf32>
    %cst_18 = arith.constant dense<0.000000e+00> : vector<32xf32>
    %59 = vector.multi_reduction <add>, %58, %cst_18 [1] : vector<32x32xf32> to vector<32xf32>
    %60 = vector.shape_cast %59 : vector<32xf32> to vector<32x1xf32>
    %cst_19 = arith.constant 3.200000e+01 : f32
    %61 = vector.broadcast %cst_19 : f32 to vector<32x1xf32>
    %62 = arith.divf %60, %61 : vector<32x1xf32>
    %63 = vector.broadcast %62 : vector<32x1xf32> to vector<32x32xf32>
    %64 = arith.subf %58, %63 : vector<32x32xf32>
    %65 = arith.mulf %64, %64 : vector<32x32xf32>
    %cst_20 = arith.constant dense<0.000000e+00> : vector<32xf32>
    %66 = vector.multi_reduction <add>, %65, %cst_20 [1] : vector<32x32xf32> to vector<32xf32>
    %67 = vector.shape_cast %66 : vector<32xf32> to vector<32x1xf32>
    %cst_21 = arith.constant 3.200000e+01 : f32
    %68 = vector.broadcast %cst_21 : f32 to vector<32x1xf32>
    %69 = arith.divf %67, %68 : vector<32x1xf32>
    %70 = vector.broadcast %62 : vector<32x1xf32> to vector<32x32xf32>
    %71 = arith.subf %58, %70 : vector<32x32xf32>
    %cst_22 = arith.constant 9.99999974E-6 : f32
    %72 = vector.broadcast %cst_22 : f32 to vector<32x1xf32>
    %73 = arith.addf %69, %72 : vector<32x1xf32>
    %74 = math.rsqrt %73 : vector<32x1xf32>
    %75 = vector.broadcast %74 : vector<32x1xf32> to vector<32x32xf32>
    %76 = arith.mulf %71, %75 : vector<32x32xf32>
    %77 = vector.broadcast %9 : vector<32x1xf32> to vector<32x32xf32>
    %78 = arith.mulf %76, %77 : vector<32x32xf32>
    %79 = vector.broadcast %10 : vector<32x1xf32> to vector<32x32xf32>
    %80 = arith.addf %78, %79 : vector<32x32xf32>
    %81 = vector.extract_strided_slice %5 {offsets = [64, 0], sizes = [32, 32], strides = [1, 1]} : vector<96x32xf32> to vector<32x32xf32>
    %cst_23 = arith.constant dense<0.000000e+00> : vector<32x32xf32>
    %82 = tpu.matmul %81, %80, %cst_23 {dimension_numbers = #tpu.dot_dimension_numbers<[1], [0], [0], [1], [0, 0, 1, 1], [], []>} : vector<32x32xf32>, vector<32x32xf32>, vector<32x32xf32> -> vector<32x32xf32>
    %83 = vector.broadcast %8 : vector<32x1xf32> to vector<32x32xf32>
    %84 = arith.addf %82, %83 : vector<32x32xf32>
    %85 = arith.addf %80, %84 : vector<32x32xf32>
    %cst_24 = arith.constant dense<0.000000e+00> : vector<32xf32>
    %86 = vector.multi_reduction <add>, %85, %cst_24 [1] : vector<32x32xf32> to vector<32xf32>
    %87 = vector.shape_cast %86 : vector<32xf32> to vector<32x1xf32>
    %cst_25 = arith.constant 3.200000e+01 : f32
    %88 = vector.broadcast %cst_25 : f32 to vector<32x1xf32>
    %89 = arith.divf %87, %88 : vector<32x1xf32>
    %90 = vector.broadcast %89 : vector<32x1xf32> to vector<32x32xf32>
    %91 = arith.subf %85, %90 : vector<32x32xf32>
    %92 = arith.mulf %91, %91 : vector<32x32xf32>
    %cst_26 = arith.constant dense<0.000000e+00> : vector<32xf32>
    %93 = vector.multi_reduction <add>, %92, %cst_26 [1] : vector<32x32xf32> to vector<32xf32>
    %94 = vector.shape_cast %93 : vector<32xf32> to vector<32x1xf32>
    %cst_27 = arith.constant 3.200000e+01 : f32
    %95 = vector.broadcast %cst_27 : f32 to vector<32x1xf32>
    %96 = arith.divf %94, %95 : vector<32x1xf32>
    %97 = vector.broadcast %89 : vector<32x1xf32> to vector<32x32xf32>
    %98 = arith.subf %85, %97 : vector<32x32xf32>
    %cst_28 = arith.constant 9.99999974E-6 : f32
    %99 = vector.broadcast %cst_28 : f32 to vector<32x1xf32>
    %100 = arith.addf %96, %99 : vector<32x1xf32>
    %101 = math.rsqrt %100 : vector<32x1xf32>
    %102 = vector.broadcast %101 : vector<32x1xf32> to vector<32x32xf32>
    %103 = arith.mulf %98, %102 : vector<32x32xf32>
    %104 = vector.broadcast %11 : vector<32x1xf32> to vector<32x32xf32>
    %105 = arith.mulf %103, %104 : vector<32x32xf32>
    %106 = vector.broadcast %12 : vector<32x1xf32> to vector<32x32xf32>
    %107 = arith.addf %105, %106 : vector<32x32xf32>
    %108 = vector.extract_strided_slice %107 {offsets = [0, 0], sizes = [32, 16], strides = [1, 1]} : vector<32x32xf32> to vector<32x16xf32>
    %c0_29 = arith.constant 0 : index
    %c0_30 = arith.constant 0 : index
    %c0_31 = arith.constant 0 : index
    %109 = vector.load %arg3[%c0_29, %c0_30, %c0_31] : memref<2x32x16xf32, #tpu.memory_space<vmem>>, vector<1x32x16xf32>
    %110 = vector.shape_cast %109 : vector<1x32x16xf32> to vector<32x16xf32>
    %111 = vector.shape_cast %108 : vector<32x16xf32> to vector<1x32x16xf32>
    tpu.vector_store %arg3[%c0_29, %c0_30, %c0_31], %111 {strides = array<i32>} : memref<2x32x16xf32, #tpu.memory_space<vmem>>, vector<1x32x16xf32>,
    %112 = vector.extract_strided_slice %107 {offsets = [0, 16], sizes = [32, 16], strides = [1, 1]} : vector<32x32xf32> to vector<32x16xf32>
    %c1_32 = arith.constant 1 : index
    %c0_33 = arith.constant 0 : index
    %c0_34 = arith.constant 0 : index
    %113 = vector.load %arg3[%c1_32, %c0_33, %c0_34] : memref<2x32x16xf32, #tpu.memory_space<vmem>>, vector<1x32x16xf32>
    %114 = vector.shape_cast %113 : vector<1x32x16xf32> to vector<32x16xf32>
    %115 = vector.shape_cast %112 : vector<32x16xf32> to vector<1x32x16xf32>
    tpu.vector_store %arg3[%c1_32, %c0_33, %c0_34], %115 {strides = array<i32>} : memref<2x32x16xf32, #tpu.memory_space<vmem>>, vector<1x32x16xf32>,
    return
  }
}

</mosaic_0001>

<llo_original>
// kernel: tpu_custom_call.1
$region0: #{tpu_custom_call.1}
  #allocation0 [shape = 'u32[]', space=smem, size = 0x4, offset = 0x4, fixed_abs, tag = 'smem constant byte address 0x4 - core index']
  #allocation1 [shape = 'u32[144,128]{1,0:T(1,128)}', space=vmem, size = 0x12000, scoped, tag = 'internal scratch']
  %s0 = inlined_call_operand.vmem [shape: f32[2,32,16], index: 0, kind: input, shape index: {}]
  %s1 = inlined_call_operand.vmem [shape: f32[96,32], index: 1, kind: input, shape index: {}]
  %s2 = inlined_call_operand.vmem [shape: f32[32,8], index: 2, kind: input, shape index: {}]
  %s3 = inlined_call_operand.vmem [shape: f32[2,32,16], index: 3, kind: output, shape index: {}]
  %s4 = sld [smem:[#allocation0]]
  $region22: #{tpu_custom_call.1} parent=0
    _
  %s6 = ssub.s32 1, %s4
  %s7 = scalar_select 0, %s6, %s4
  // Predicated region
  $region2: #{tpu_custom_call.1} parent=0 // pred_check
    _
  $region3: #{tpu_custom_call.1} parent=0 // pred_check_branch
    %9 = sbr.rel (0) target = $region5
  $region4: #{tpu_custom_call.1} parent=0 // pred_region
    _
  $region5: #{tpu_custom_call.1} parent=0 // pred_fallthru
    _
  // Predicated region
  $region6: #{tpu_custom_call.1} parent=0 // pred_check
    _
  $region7: #{tpu_custom_call.1} parent=0 // pred_check_branch
    %11 = sbr.rel (0) target = $region9
  $region8: #{tpu_custom_call.1} parent=0 // pred_region
    _
  $region9: #{tpu_custom_call.1} parent=0 // pred_fallthru
    _
  // Predicated region
  $region10: #{tpu_custom_call.1} parent=0 // pred_check
    _
  $region11: #{tpu_custom_call.1} parent=0 // pred_check_branch
    %13 = sbr.rel (0) target = $region13
  $region12: #{tpu_custom_call.1} parent=0 // pred_region
    _
  $region13: #{tpu_custom_call.1} parent=0 // pred_fallthru
    _
  %v14 = vld [vmem:[%s0] sm:$0xff]
  %v15 = vld [vmem:[%s0 + $0x8] sm:$0xff]
  %v16 = vld [vmem:[%s0 + $0x10] sm:$0xff]
  %v17 = vld [vmem:[%s0 + $0x18] sm:$0xff]
  %s18 = scalar_lea.vmem %s0, 32
  %v19 = vld [vmem:[%s18] sm:$0xff]
  %v20 = vld [vmem:[%s18 + $0x8] sm:$0xff]
  %v21 = vld [vmem:[%s18 + $0x10] sm:$0xff]
  %v22 = vld [vmem:[%s18 + $0x18] sm:$0xff]
  %27 = vrot.lane.b32.xlu0 %v19, 16
  %v28 = vpop.permute.xlu0 %27
  %29 = vrot.lane.b32.xlu0 %v20, 16
  %v30 = vpop.permute.xlu0 %29
  %31 = vrot.lane.b32.xlu0 %v21, 16
  %v32 = vpop.permute.xlu0 %31
  %33 = vrot.lane.b32.xlu0 %v22, 16
  %v34 = vpop.permute.xlu0 %33
  %vm39 = vcmask 130048
  %v40 = vsel %vm39, %v14, %v28
  %v41 = vsel %vm39, %v15, %v30
  %v42 = vsel %vm39, %v16, %v32
  %v43 = vsel %vm39, %v17, %v34
  %v44 = vld [vmem:[%s1] sm:$0xff]
  %v45 = vld [vmem:[%s1 + $0x8] sm:$0xff]
  %v46 = vld [vmem:[%s1 + $0x10] sm:$0xff]
  %v47 = vld [vmem:[%s1 + $0x18] sm:$0xff]
  %v48 = vld [vmem:[%s1 + $0x20] sm:$0xff]
  %v49 = vld [vmem:[%s1 + $0x28] sm:$0xff]
  %v50 = vld [vmem:[%s1 + $0x30] sm:$0xff]
  %v51 = vld [vmem:[%s1 + $0x38] sm:$0xff]
  %v52 = vld [vmem:[%s1 + $0x40] sm:$0xff]
  %v53 = vld [vmem:[%s1 + $0x48] sm:$0xff]
  %v54 = vld [vmem:[%s1 + $0x50] sm:$0xff]
  %v55 = vld [vmem:[%s1 + $0x58] sm:$0xff]
  %v56 = vld [vmem:[%s2] sm:$0xff]
  %v57 = vld [vmem:[%s2 + $0x8] sm:$0xff]
  %v58 = vld [vmem:[%s2 + $0x10] sm:$0xff]
  %v59 = vld [vmem:[%s2 + $0x18] sm:$0xff]
  %vm60 = vcmask 261120
  %v62 = vsel %vm60, %v44, 0
  %v65 = vsel %vm60, %v45, 0
  %v68 = vsel %vm60, %v46, 0
  %v71 = vsel %vm60, %v47, 0
  %v74 = vsel %vm60, %v48, 0
  %v77 = vsel %vm60, %v49, 0
  %v80 = vsel %vm60, %v50, 0
  %v83 = vsel %vm60, %v51, 0
  %85 = vmatprep.subr.mxu0 0.0
  %86 = vmatpush1.msra.mxu0 %v40
  %87 = vmatprep.subr.mxu0 0.0
  %88 = vmatpush1.msra.mxu0 %v41
  %89 = vmatprep.subr.mxu0 0.0
  %90 = vmatpush1.msra.mxu0 %v42
  %91 = vmatprep.subr.mxu0 0.0
  %92 = vmatpush1.msra.mxu0 %v43
  %93 = vmatprep.subr.mxu0 0.0
  %94 = vmatpush1.msra.mxu0 0.0
  %95 = vmatprep.subr.mxu0 0.0
  %96 = vmatpush1.msra.mxu0 0.0
  %97 = vmatprep.subr.mxu0 0.0
  %98 = vmatpush1.msra.mxu0 0.0
  %99 = vmatprep.subr.mxu0 0.0
  %100 = vmatpush1.msra.mxu0 0.0
  %101 = vmatprep.subr.mxu0 0.0
  %102 = vmatpush1.msra.mxu0 0.0
  %103 = vmatprep.subr.mxu0 0.0
  %104 = vmatpush1.msra.mxu0 0.0
  %105 = vmatprep.subr.mxu0 0.0
  %106 = vmatpush1.msra.mxu0 0.0
  %107 = vmatprep.subr.mxu0 0.0
  %108 = vmatpush1.msra.mxu0 0.0
  %109 = vmatprep.subr.mxu0 0.0
  %110 = vmatpush1.msra.mxu0 0.0
  %111 = vmatprep.subr.mxu0 0.0
  %112 = vmatpush1.msra.mxu0 0.0
  %113 = vmatprep.subr.mxu0 0.0
  %114 = vmatpush1.msra.mxu0 0.0
  %115 = vmatprep.subr.mxu0 0.0
  %116 = vmatpush1.msra.mxu0 0.0
  %117 = vmatprep.subr.mxu0 0.0
  %118 = vmatpush1.msra.mxu0 0.0
  %119 = vmatprep.subr.mxu0 0.0
  %120 = vmatpush1.msra.mxu0 0.0
  %121 = vmatprep.subr.mxu0 0.0
  %122 = vmatpush1.msra.mxu0 0.0
  %123 = vmatprep.subr.mxu0 0.0
  %124 = vmatpush1.msra.mxu0 0.0
  %125 = vmatprep.subr.mxu0 0.0
  %126 = vmatpush1.msra.mxu0 0.0
  %127 = vmatprep.subr.mxu0 0.0
  %128 = vmatpush1.msra.mxu0 0.0
  %129 = vmatprep.subr.mxu0 0.0
  %130 = vmatpush1.msra.mxu0 0.0
  %131 = vmatprep.subr.mxu0 0.0
  %132 = vmatpush1.msra.mxu0 0.0
  %133 = vmatprep.subr.mxu0 0.0
  %134 = vmatpush1.msra.mxu0 0.0
  %135 = vmatprep.subr.mxu0 0.0
  %136 = vmatpush1.msra.mxu0 0.0
  %137 = vmatprep.subr.mxu0 0.0
  %138 = vmatpush1.msra.mxu0 0.0
  %139 = vmatprep.subr.mxu0 0.0
  %140 = vmatpush1.msra.mxu0 0.0
  %141 = vmatprep.subr.mxu0 0.0
  %142 = vmatpush1.msra.mxu0 0.0
  %143 = vmatprep.subr.mxu0 0.0
  %144 = vmatpush1.msra.mxu0 0.0
  %145 = vmatprep.subr.mxu0 0.0
  %146 = vmatpush1.msra.mxu0 0.0
  %147 = vmatprep.subr.mxu0 0.0
  %148 = vmatpush1.msra.mxu0 0.0
  %149 = vmatprep.mubr.f32.mxu0 0.0
  %150 = vmatmul.mubr.f32.gmra.mrb[0].mxu0 %v62
  %v151 = vpop.f32.mrb[0].mxu0
  %v152 = vadd.f32 0.0, %v151
  %v153 = vpop.f32.mrb[0].mxu0
  %154 = vmatprep.mubr.f32.mxu0 0.0
  %155 = vmatmul.mubr.f32.gmra.mrb[0].mxu0 %v65
  %v156 = vpop.f32.mrb[0].mxu0
  %v157 = vadd.f32 0.0, %v156
  %v158 = vpop.f32.mrb[0].mxu0
  %159 = vmatprep.mubr.f32.mxu0 0.0
  %160 = vmatmul.mubr.f32.gmra.mrb[0].mxu0 %v68
  %v161 = vpop.f32.mrb[0].mxu0
  %v162 = vadd.f32 0.0, %v161
  %v163 = vpop.f32.mrb[0].mxu0
  %164 = vmatprep.mubr.f32.mxu0 0.0
  %165 = vmatmul.mubr.f32.gmra.mrb[0].mxu0 %v71
  %v166 = vpop.f32.mrb[0].mxu0
  %v167 = vadd.f32 0.0, %v166
  %v168 = vpop.f32.mrb[0].mxu0
  %169 = vmatprep.mubr.f32.mxu0 0.0
  %170 = vmatmul.mubr.f32.gmra.mrb[0].mxu0 %v74
  %v171 = vpop.f32.mrb[0].mxu0
  %v172 = vadd.f32 0.0, %v171
  %v173 = vpop.f32.mrb[0].mxu0
  %174 = vmatprep.mubr.f32.mxu0 0.0
  %175 = vmatmul.mubr.f32.gmra.mrb[0].mxu0 %v77
  %v176 = vpop.f32.mrb[0].mxu0
  %v177 = vadd.f32 0.0, %v176
  %v178 = vpop.f32.mrb[0].mxu0
  %179 = vmatprep.mubr.f32.mxu0 0.0
  %180 = vmatmul.mubr.f32.gmra.mrb[0].mxu0 %v80
  %v181 = vpop.f32.mrb[0].mxu0
  %v182 = vadd.f32 0.0, %v181
  %v183 = vpop.f32.mrb[0].mxu0
  %184 = vmatprep.mubr.f32.mxu0 0.0
  %185 = vmatmul.mubr.f32.gmra.mrb[0].mxu0 %v83
  %v186 = vpop.f32.mrb[0].mxu0
  %v187 = vadd.f32 0.0, %v186
  %v188 = vpop.f32.mrb[0].mxu0
  %189 = vdwg.mxu0
  %191 = vset.pattern.permute.xlu0 0
  %192 = vperm.xlu0 %191, %v56
  %v193 = vpop.permute.xlu0 %192
  %196 = vset.pattern.permute.xlu0 0
  %197 = vperm.xlu0 %196, %v57
  %v198 = vpop.permute.xlu0 %197
  %201 = vset.pattern.permute.xlu0 0
  %202 = vperm.xlu0 %201, %v58
  %v203 = vpop.permute.xlu0 %202
  %206 = vset.pattern.permute.xlu0 0
  %207 = vperm.xlu0 %206, %v59
  %v208 = vpop.permute.xlu0 %207
  %v210 = vadd.f32 %v172, %v193
  %v211 = vadd.f32 %v177, %v198
  %v212 = vadd.f32 %v182, %v203
  %v213 = vadd.f32 %v187, %v208
  %214 = vxpose.xlu0.b32.start [1/16] %v152, 128
  %215 = vxpose.xlu0.b32.cont [2/16] 0.0, 128
  %216 = vxpose.xlu0.b32.cont [3/16] 0.0, 128
  %217 = vxpose.xlu0.b32.cont [4/16] 0.0, 128
  %218 = vxpose.xlu0.b32.cont [5/16] 0.0, 128
  %219 = vxpose.xlu0.b32.cont [6/16] 0.0, 128
  %220 = vxpose.xlu0.b32.cont [7/16] 0.0, 128
  %221 = vxpose.xlu0.b32.cont [8/16] 0.0, 128
  %222 = vxpose.xlu0.b32.cont [9/16] 0.0, 128
  %223 = vxpose.xlu0.b32.cont [10/16] 0.0, 128
  %224 = vxpose.xlu0.b32.cont [11/16] 0.0, 128
  %225 = vxpose.xlu0.b32.cont [12/16] 0.0, 128
  %226 = vxpose.xlu0.b32.cont [13/16] 0.0, 128
  %227 = vxpose.xlu0.b32.cont [14/16] 0.0, 128
  %228 = vxpose.xlu0.b32.cont [15/16] 0.0, 128
  %229 = vxpose.xlu0.b32.end [16/16] 0.0, 128
  %v230 = vpop.trf.xlu0
  %v231 = vpop.trf.xlu0
  %v232 = vpop.trf.xlu0
  %v233 = vpop.trf.xlu0
  %v234 = vpop.trf.xlu0
  %v235 = vpop.trf.xlu0
  %v236 = vpop.trf.xlu0
  %v237 = vpop.trf.xlu0
  %v238 = vpop.trf.xlu0
  %v239 = vpop.trf.xlu0
  %v240 = vpop.trf.xlu0
  %v241 = vpop.trf.xlu0
  %v242 = vpop.trf.xlu0
  %v243 = vpop.trf.xlu0
  %v244 = vpop.trf.xlu0
  %v245 = vpop.trf.xlu0
  %246 = vxpose.xlu0.b32.start [1/16] %v157, 128
  %247 = vxpose.xlu0.b32.cont [2/16] 0.0, 128
  %248 = vxpose.xlu0.b32.cont [3/16] 0.0, 128
  %249 = vxpose.xlu0.b32.cont [4/16] 0.0, 128
  %250 = vxpose.xlu0.b32.cont [5/16] 0.0, 128
  %251 = vxpose.xlu0.b32.cont [6/16] 0.0, 128
  %252 = vxpose.xlu0.b32.cont [7/16] 0.0, 128
  %253 = vxpose.xlu0.b32.cont [8/16] 0.0, 128
  %254 = vxpose.xlu0.b32.cont [9/16] 0.0, 128
  %255 = vxpose.xlu0.b32.cont [10/16] 0.0, 128
  %256 = vxpose.xlu0.b32.cont [11/16] 0.0, 128
  %257 = vxpose.xlu0.b32.cont [12/16] 0.0, 128
  %258 = vxpose.xlu0.b32.cont [13/16] 0.0, 128
  %259 = vxpose.xlu0.b32.cont [14/16] 0.0, 128
  %260 = vxpose.xlu0.b32.cont [15/16] 0.0, 128
  %261 = vxpose.xlu0.b32.end [16/16] 0.0, 128
  %v262 = vpop.trf.xlu0
  %v263 = vpop.trf.xlu0
  %v264 = vpop.trf.xlu0
  %v265 = vpop.trf.xlu0
  %v266 = vpop.trf.xlu0
  %v267 = vpop.trf.xlu0
  %v268 = vpop.trf.xlu0
  %v269 = vpop.trf.xlu0
  %v270 = vpop.trf.xlu0
  %v271 = vpop.trf.xlu0
  %v272 = vpop.trf.xlu0
  %v273 = vpop.trf.xlu0
  %v274 = vpop.trf.xlu0
  %v275 = vpop.trf.xlu0
  %v276 = vpop.trf.xlu0
  %v277 = vpop.trf.xlu0
  %278 = vxpose.xlu0.b32.start [1/16] %v162, 128
  %279 = vxpose.xlu0.b32.cont [2/16] 0.0, 128
  %280 = vxpose.xlu0.b32.cont [3/16] 0.0, 128
  %281 = vxpose.xlu0.b32.cont [4/16] 0.0, 128
  %282 = vxpose.xlu0.b32.cont [5/16] 0.0, 128
  %283 = vxpose.xlu0.b32.cont [6/16] 0.0, 128
  %284 = vxpose.xlu0.b32.cont [7/16] 0.0, 128
  %285 = vxpose.xlu0.b32.cont [8/16] 0.0, 128
  %286 = vxpose.xlu0.b32.cont [9/16] 0.0, 128
  %287 = vxpose.xlu0.b32.cont [10/16] 0.0, 128
  %288 = vxpose.xlu0.b32.cont [11/16] 0.0, 128
  %289 = vxpose.xlu0.b32.cont [12/16] 0.0, 128
  %290 = vxpose.xlu0.b32.cont [13/16] 0.0, 128
  %291 = vxpose.xlu0.b32.cont [14/16] 0.0, 128
  %292 = vxpose.xlu0.b32.cont [15/16] 0.0, 128
  %293 = vxpose.xlu0.b32.end [16/16] 0.0, 128
  %v294 = vpop.trf.xlu0
  %v295 = vpop.trf.xlu0
  %v296 = vpop.trf.xlu0
  %v297 = vpop.trf.xlu0
  %v298 = vpop.trf.xlu0
  %v299 = vpop.trf.xlu0
  %v300 = vpop.trf.xlu0
  %v301 = vpop.trf.xlu0
  %v302 = vpop.trf.xlu0
  %v303 = vpop.trf.xlu0
  %v304 = vpop.trf.xlu0
  %v305 = vpop.trf.xlu0
  %v306 = vpop.trf.xlu0
  %v307 = vpop.trf.xlu0
  %v308 = vpop.trf.xlu0
  %v309 = vpop.trf.xlu0
  %310 = vxpose.xlu0.b32.start [1/16] %v167, 128
  %311 = vxpose.xlu0.b32.cont [2/16] 0.0, 128
  %312 = vxpose.xlu0.b32.cont [3/16] 0.0, 128
  %313 = vxpose.xlu0.b32.cont [4/16] 0.0, 128
  %314 = vxpose.xlu0.b32.cont [5/16] 0.0, 128
  %315 = vxpose.xlu0.b32.cont [6/16] 0.0, 128
  %316 = vxpose.xlu0.b32.cont [7/16] 0.0, 128
  %317 = vxpose.xlu0.b32.cont [8/16] 0.0, 128
  %318 = vxpose.xlu0.b32.cont [9/16] 0.0, 128
  %319 = vxpose.xlu0.b32.cont [10/16] 0.0, 128
  %320 = vxpose.xlu0.b32.cont [11/16] 0.0, 128
  %321 = vxpose.xlu0.b32.cont [12/16] 0.0, 128
  %322 = vxpose.xlu0.b32.cont [13/16] 0.0, 128
  %323 = vxpose.xlu0.b32.cont [14/16] 0.0, 128
  %324 = vxpose.xlu0.b32.cont [15/16] 0.0, 128
  %325 = vxpose.xlu0.b32.end [16/16] 0.0, 128
  %v326 = vpop.trf.xlu0
  %v327 = vpop.trf.xlu0
  %v328 = vpop.trf.xlu0
  %v329 = vpop.trf.xlu0
  %v330 = vpop.trf.xlu0
  %v331 = vpop.trf.xlu0
  %v332 = vpop.trf.xlu0
  %v333 = vpop.trf.xlu0
  %v334 = vpop.trf.xlu0
  %v335 = vpop.trf.xlu0
  %v336 = vpop.trf.xlu0
  %v337 = vpop.trf.xlu0
  %v338 = vpop.trf.xlu0
  %v339 = vpop.trf.xlu0
  %v340 = vpop.trf.xlu0
  %v341 = vpop.trf.xlu0
  %vm342 = vcmask 64512
  %v344 = vsel %vm342, %v230, 0
  %v347 = vsel %vm342, %v231, 0
  %349 = vmatprep.subr.mxu0 0.0
  %350 = vmatpush1.xpose.msra.mxu0 %v344
  %351 = vmatprep.subr.mxu0 0.0
  %352 = vmatpush1.xpose.msra.mxu0 %v347
  %353 = vmatprep.subr.mxu0 0.0
  %354 = vmatpush1.xpose.msra.mxu0 0.0
  %355 = vmatprep.subr.mxu0 0.0
  %356 = vmatpush1.xpose.msra.mxu0 0.0
  %357 = vmatprep.subr.mxu0 0.0
  %358 = vmatpush1.xpose.msra.mxu0 0.0
  %359 = vmatprep.subr.mxu0 0.0
  %360 = vmatpush1.xpose.msra.mxu0 0.0
  %361 = vmatprep.subr.mxu0 0.0
  %362 = vmatpush1.xpose.msra.mxu0 0.0
  %363 = vmatprep.subr.mxu0 0.0
  %364 = vmatpush1.xpose.msra.mxu0 0.0
  %365 = vmatprep.subr.mxu0 0.0
  %366 = vmatpush1.xpose.msra.mxu0 0.0
  %367 = vmatprep.subr.mxu0 0.0
  %368 = vmatpush1.xpose.msra.mxu0 0.0
  %369 = vmatprep.subr.mxu0 0.0
  %370 = vmatpush1.xpose.msra.mxu0 0.0
  %371 = vmatprep.subr.mxu0 0.0
  %372 = vmatpush1.xpose.msra.mxu0 0.0
  %373 = vmatprep.subr.mxu0 0.0
  %374 = vmatpush1.xpose.msra.mxu0 0.0
  %375 = vmatprep.subr.mxu0 0.0
  %376 = vmatpush1.xpose.msra.mxu0 0.0
  %377 = vmatprep.subr.mxu0 0.0
  %378 = vmatpush1.xpose.msra.mxu0 0.0
  %379 = vmatprep.subr.mxu0 0.0
  %380 = vmatpush1.xpose.msra.mxu0 0.0
  %381 = vmatprep.subr.mxu0 0.0
  %382 = vmatpush1.xpose.msra.mxu0 0.0
  %383 = vmatprep.subr.mxu0 0.0
  %384 = vmatpush1.xpose.msra.mxu0 0.0
  %385 = vmatprep.subr.mxu0 0.0
  %386 = vmatpush1.xpose.msra.mxu0 0.0
  %387 = vmatprep.subr.mxu0 0.0
  %388 = vmatpush1.xpose.msra.mxu0 0.0
  %389 = vmatprep.subr.mxu0 0.0
  %390 = vmatpush1.xpose.msra.mxu0 0.0
  %391 = vmatprep.subr.mxu0 0.0
  %392 = vmatpush1.xpose.msra.mxu0 0.0
  %393 = vmatprep.subr.mxu0 0.0
  %394 = vmatpush1.xpose.msra.mxu0 0.0
  %395 = vmatprep.subr.mxu0 0.0
  %396 = vmatpush1.xpose.msra.mxu0 0.0
  %397 = vmatprep.subr.mxu0 0.0
  %398 = vmatpush1.xpose.msra.mxu0 0.0
  %399 = vmatprep.subr.mxu0 0.0
  %400 = vmatpush1.xpose.msra.mxu0 0.0
  %401 = vmatprep.subr.mxu0 0.0
  %402 = vmatpush1.xpose.msra.mxu0 0.0
  %403 = vmatprep.subr.mxu0 0.0
  %404 = vmatpush1.xpose.msra.mxu0 0.0
  %405 = vmatprep.subr.mxu0 0.0
  %406 = vmatpush1.xpose.msra.mxu0 0.0
  %407 = vmatprep.subr.mxu0 0.0
  %408 = vmatpush1.xpose.msra.mxu0 0.0
  %409 = vmatprep.subr.mxu0 0.0
  %410 = vmatpush1.xpose.msra.mxu0 0.0
  %411 = vmatprep.subr.mxu0 0.0
  %412 = vmatpush1.xpose.msra.mxu0 0.0
  %413 = vmatprep.mubr.f32.mxu0 0.0
  %414 = vmatmul.mubr.f32.gmra.mrb[0].mxu0 %v344
  %v415 = vpop.f32.mrb[0].mxu0
  %v416 = vadd.f32 0.0, %v415
  %v417 = vpop.f32.mrb[0].mxu0
  %418 = vmatprep.mubr.f32.mxu0 0.0
  %419 = vmatmul.mubr.f32.gmra.mrb[0].mxu0 %v347
  %v420 = vpop.f32.mrb[0].mxu0
  %v421 = vadd.f32 0.0, %v420
  %v422 = vpop.f32.mrb[0].mxu0
  %423 = vdwg.mxu0
  %v425 = vsel %vm342, %v262, 0
  %v428 = vsel %vm342, %v263, 0
  %430 = vmatprep.subr.mxu0 0.0
  %431 = vmatpush1.xpose.msra.mxu0 %v425
  %432 = vmatprep.subr.mxu0 0.0
  %433 = vmatpush1.xpose.msra.mxu0 %v428
  %434 = vmatprep.subr.mxu0 0.0
  %435 = vmatpush1.xpose.msra.mxu0 0.0
  %436 = vmatprep.subr.mxu0 0.0
  %437 = vmatpush1.xpose.msra.mxu0 0.0
  %438 = vmatprep.subr.mxu0 0.0
  %439 = vmatpush1.xpose.msra.mxu0 0.0
  %440 = vmatprep.subr.mxu0 0.0
  %441 = vmatpush1.xpose.msra.mxu0 0.0
  %442 = vmatprep.subr.mxu0 0.0
  %443 = vmatpush1.xpose.msra.mxu0 0.0
  %444 = vmatprep.subr.mxu0 0.0
  %445 = vmatpush1.xpose.msra.mxu0 0.0
  %446 = vmatprep.subr.mxu0 0.0
  %447 = vmatpush1.xpose.msra.mxu0 0.0
  %448 = vmatprep.subr.mxu0 0.0
  %449 = vmatpush1.xpose.msra.mxu0 0.0
  %450 = vmatprep.subr.mxu0 0.0
  %451 = vmatpush1.xpose.msra.mxu0 0.0
  %452 = vmatprep.subr.mxu0 0.0
  %453 = vmatpush1.xpose.msra.mxu0 0.0
  %454 = vmatprep.subr.mxu0 0.0
  %455 = vmatpush1.xpose.msra.mxu0 0.0
  %456 = vmatprep.subr.mxu0 0.0
  %457 = vmatpush1.xpose.msra.mxu0 0.0
  %458 = vmatprep.subr.mxu0 0.0
  %459 = vmatpush1.xpose.msra.mxu0 0.0
  %460 = vmatprep.subr.mxu0 0.0
  %461 = vmatpush1.xpose.msra.mxu0 0.0
  %462 = vmatprep.subr.mxu0 0.0
  %463 = vmatpush1.xpose.msra.mxu0 0.0
  %464 = vmatprep.subr.mxu0 0.0
  %465 = vmatpush1.xpose.msra.mxu0 0.0
  %466 = vmatprep.subr.mxu0 0.0
  %467 = vmatpush1.xpose.msra.mxu0 0.0
  %468 = vmatprep.subr.mxu0 0.0
  %469 = vmatpush1.xpose.msra.mxu0 0.0
  %470 = vmatprep.subr.mxu0 0.0
  %471 = vmatpush1.xpose.msra.mxu0 0.0
  %472 = vmatprep.subr.mxu0 0.0
  %473 = vmatpush1.xpose.msra.mxu0 0.0
  %474 = vmatprep.subr.mxu0 0.0
  %475 = vmatpush1.xpose.msra.mxu0 0.0
  %476 = vmatprep.subr.mxu0 0.0
  %477 = vmatpush1.xpose.msra.mxu0 0.0
  %478 = vmatprep.subr.mxu0 0.0
  %479 = vmatpush1.xpose.msra.mxu0 0.0
  %480 = vmatprep.subr.mxu0 0.0
  %481 = vmatpush1.xpose.msra.mxu0 0.0
  %482 = vmatprep.subr.mxu0 0.0
  %483 = vmatpush1.xpose.msra.mxu0 0.0
  %484 = vmatprep.subr.mxu0 0.0
  %485 = vmatpush1.xpose.msra.mxu0 0.0
  %486 = vmatprep.subr.mxu0 0.0
  %487 = vmatpush1.xpose.msra.mxu0 0.0
  %488 = vmatprep.subr.mxu0 0.0
  %489 = vmatpush1.xpose.msra.mxu0 0.0
  %490 = vmatprep.subr.mxu0 0.0
  %491 = vmatpush1.xpose.msra.mxu0 0.0
  %492 = vmatprep.subr.mxu0 0.0
  %493 = vmatpush1.xpose.msra.mxu0 0.0
  %494 = vmatprep.mubr.f32.mxu0 0.0
  %495 = vmatmul.mubr.f32.gmra.mrb[0].mxu0 %v425
  %v496 = vpop.f32.mrb[0].mxu0
  %v497 = vadd.f32 0.0, %v496
  %v498 = vpop.f32.mrb[0].mxu0
  %499 = vmatprep.mubr.f32.mxu0 0.0
  %500 = vmatmul.mubr.f32.gmra.mrb[0].mxu0 %v428
  %v501 = vpop.f32.mrb[0].mxu0
  %v502 = vadd.f32 0.0, %v501
  %v503 = vpop.f32.mrb[0].mxu0
  %504 = vdwg.mxu0
  %v506 = vsel %vm342, %v294, 0
  %v509 = vsel %vm342, %v295, 0
  %511 = vmatprep.subr.mxu0 0.0
  %512 = vmatpush1.xpose.msra.mxu0 %v506
  %513 = vmatprep.subr.mxu0 0.0
  %514 = vmatpush1.xpose.msra.mxu0 %v509
  %515 = vmatprep.subr.mxu0 0.0
  %516 = vmatpush1.xpose.msra.mxu0 0.0
  %517 = vmatprep.subr.mxu0 0.0
  %518 = vmatpush1.xpose.msra.mxu0 0.0
  %519 = vmatprep.subr.mxu0 0.0
  %520 = vmatpush1.xpose.msra.mxu0 0.0
  %521 = vmatprep.subr.mxu0 0.0
  %522 = vmatpush1.xpose.msra.mxu0 0.0
  %523 = vmatprep.subr.mxu0 0.0
  %524 = vmatpush1.xpose.msra.mxu0 0.0
  %525 = vmatprep.subr.mxu0 0.0
  %526 = vmatpush1.xpose.msra.mxu0 0.0
  %527 = vmatprep.subr.mxu0 0.0
  %528 = vmatpush1.xpose.msra.mxu0 0.0
  %529 = vmatprep.subr.mxu0 0.0
  %530 = vmatpush1.xpose.msra.mxu0 0.0
  %531 = vmatprep.subr.mxu0 0.0
  %532 = vmatpush1.xpose.msra.mxu0 0.0
  %533 = vmatprep.subr.mxu0 0.0
  %534 = vmatpush1.xpose.msra.mxu0 0.0
  %535 = vmatprep.subr.mxu0 0.0
  %536 = vmatpush1.xpose.msra.mxu0 0.0
  %537 = vmatprep.subr.mxu0 0.0
  %538 = vmatpush1.xpose.msra.mxu0 0.0
  %539 = vmatprep.subr.mxu0 0.0
  %540 = vmatpush1.xpose.msra.mxu0 0.0
  %541 = vmatprep.subr.mxu0 0.0
  %542 = vmatpush1.xpose.msra.mxu0 0.0
  %543 = vmatprep.subr.mxu0 0.0
  %544 = vmatpush1.xpose.msra.mxu0 0.0
  %545 = vmatprep.subr.mxu0 0.0
  %546 = vmatpush1.xpose.msra.mxu0 0.0
  %547 = vmatprep.subr.mxu0 0.0
  %548 = vmatpush1.xpose.msra.mxu0 0.0
  %549 = vmatprep.subr.mxu0 0.0
  %550 = vmatpush1.xpose.msra.mxu0 0.0
  %551 = vmatprep.subr.mxu0 0.0
  %552 = vmatpush1.xpose.msra.mxu0 0.0
  %553 = vmatprep.subr.mxu0 0.0
  %554 = vmatpush1.xpose.msra.mxu0 0.0
  %555 = vmatprep.subr.mxu0 0.0
  %556 = vmatpush1.xpose.msra.mxu0 0.0
  %557 = vmatprep.subr.mxu0 0.0
  %558 = vmatpush1.xpose.msra.mxu0 0.0
  %559 = vmatprep.subr.mxu0 0.0
  %560 = vmatpush1.xpose.msra.mxu0 0.0
  %561 = vmatprep.subr.mxu0 0.0
  %562 = vmatpush1.xpose.msra.mxu0 0.0
  %563 = vmatprep.subr.mxu0 0.0
  %564 = vmatpush1.xpose.msra.mxu0 0.0
  %565 = vmatprep.subr.mxu0 0.0
  %566 = vmatpush1.xpose.msra.mxu0 0.0
  %567 = vmatprep.subr.mxu0 0.0
  %568 = vmatpush1.xpose.msra.mxu0 0.0
  %569 = vmatprep.subr.mxu0 0.0
  %570 = vmatpush1.xpose.msra.mxu0 0.0
  %571 = vmatprep.subr.mxu0 0.0
  %572 = vmatpush1.xpose.msra.mxu0 0.0
  %573 = vmatprep.subr.mxu0 0.0
  %574 = vmatpush1.xpose.msra.mxu0 0.0
  %575 = vmatprep.mubr.f32.mxu0 0.0
  %576 = vmatmul.mubr.f32.gmra.mrb[0].mxu0 %v506
  %v577 = vpop.f32.mrb[0].mxu0
  %v578 = vadd.f32 0.0, %v577
  %v579 = vpop.f32.mrb[0].mxu0
  %580 = vmatprep.mubr.f32.mxu0 0.0
  %581 = vmatmul.mubr.f32.gmra.mrb[0].mxu0 %v509
  %v582 = vpop.f32.mrb[0].mxu0
  %v583 = vadd.f32 0.0, %v582
  %v584 = vpop.f32.mrb[0].mxu0
  %585 = vdwg.mxu0
  %v587 = vsel %vm342, %v326, 0
  %v590 = vsel %vm342, %v327, 0
  %592 = vmatprep.subr.mxu0 0.0
  %593 = vmatpush1.xpose.msra.mxu0 %v587
  %594 = vmatprep.subr.mxu0 0.0
  %595 = vmatpush1.xpose.msra.mxu0 %v590
  %596 = vmatprep.subr.mxu0 0.0
  %597 = vmatpush1.xpose.msra.mxu0 0.0
  %598 = vmatprep.subr.mxu0 0.0
  %599 = vmatpush1.xpose.msra.mxu0 0.0
  %600 = vmatprep.subr.mxu0 0.0
  %601 = vmatpush1.xpose.msra.mxu0 0.0
  %602 = vmatprep.subr.mxu0 0.0
  %603 = vmatpush1.xpose.msra.mxu0 0.0
  %604 = vmatprep.subr.mxu0 0.0
  %605 = vmatpush1.xpose.msra.mxu0 0.0
  %606 = vmatprep.subr.mxu0 0.0
  %607 = vmatpush1.xpose.msra.mxu0 0.0
  %608 = vmatprep.subr.mxu0 0.0
  %609 = vmatpush1.xpose.msra.mxu0 0.0
  %610 = vmatprep.subr.mxu0 0.0
  %611 = vmatpush1.xpose.msra.mxu0 0.0
  %612 = vmatprep.subr.mxu0 0.0
  %613 = vmatpush1.xpose.msra.mxu0 0.0
  %614 = vmatprep.subr.mxu0 0.0
  %615 = vmatpush1.xpose.msra.mxu0 0.0
  %616 = vmatprep.subr.mxu0 0.0
  %617 = vmatpush1.xpose.msra.mxu0 0.0
  %618 = vmatprep.subr.mxu0 0.0
  %619 = vmatpush1.xpose.msra.mxu0 0.0
  %620 = vmatprep.subr.mxu0 0.0
  %621 = vmatpush1.xpose.msra.mxu0 0.0
  %622 = vmatprep.subr.mxu0 0.0
  %623 = vmatpush1.xpose.msra.mxu0 0.0
  %624 = vmatprep.subr.mxu0 0.0
  %625 = vmatpush1.xpose.msra.mxu0 0.0
  %626 = vmatprep.subr.mxu0 0.0
  %627 = vmatpush1.xpose.msra.mxu0 0.0
  %628 = vmatprep.subr.mxu0 0.0
  %629 = vmatpush1.xpose.msra.mxu0 0.0
  %630 = vmatprep.subr.mxu0 0.0
  %631 = vmatpush1.xpose.msra.mxu0 0.0
  %632 = vmatprep.subr.mxu0 0.0
  %633 = vmatpush1.xpose.msra.mxu0 0.0
  %634 = vmatprep.subr.mxu0 0.0
  %635 = vmatpush1.xpose.msra.mxu0 0.0
  %636 = vmatprep.subr.mxu0 0.0
  %637 = vmatpush1.xpose.msra.mxu0 0.0
  %638 = vmatprep.subr.mxu0 0.0
  %639 = vmatpush1.xpose.msra.mxu0 0.0
  %640 = vmatprep.subr.mxu0 0.0
  %641 = vmatpush1.xpose.msra.mxu0 0.0
  %642 = vmatprep.subr.mxu0 0.0
  %643 = vmatpush1.xpose.msra.mxu0 0.0
  %644 = vmatprep.subr.mxu0 0.0
  %645 = vmatpush1.xpose.msra.mxu0 0.0
  %646 = vmatprep.subr.mxu0 0.0
  %647 = vmatpush1.xpose.msra.mxu0 0.0
  %648 = vmatprep.subr.mxu0 0.0
  %649 = vmatpush1.xpose.msra.mxu0 0.0
  %650 = vmatprep.subr.mxu0 0.0
  %651 = vmatpush1.xpose.msra.mxu0 0.0
  %652 = vmatprep.subr.mxu0 0.0
  %653 = vmatpush1.xpose.msra.mxu0 0.0
  %654 = vmatprep.subr.mxu0 0.0
  %655 = vmatpush1.xpose.msra.mxu0 0.0
  %656 = vmatprep.mubr.f32.mxu0 0.0
  %657 = vmatmul.mubr.f32.gmra.mrb[0].mxu0 %v587
  %v658 = vpop.f32.mrb[0].mxu0
  %v659 = vadd.f32 0.0, %v658
  %v660 = vpop.f32.mrb[0].mxu0
  %661 = vmatprep.mubr.f32.mxu0 0.0
  %662 = vmatmul.mubr.f32.gmra.mrb[0].mxu0 %v590
  %v663 = vpop.f32.mrb[0].mxu0
  %v664 = vadd.f32 0.0, %v663
  %v665 = vpop.f32.mrb[0].mxu0
  %666 = vdwg.mxu0
  %v667 = vmul.f32 %v416, 0.35355338
  %v668 = vmul.f32 %v421, 0.35355338
  %v669 = vmul.f32 %v497, 0.35355338
  %v670 = vmul.f32 %v502, 0.35355338
  %v671 = vmul.f32 %v578, 0.35355338
  %v672 = vmul.f32 %v583, 0.35355338
  %v673 = vmul.f32 %v659, 0.35355338
  %v674 = vmul.f32 %v664, 0.35355338
  %v675 = vsel %vm39, %v667, -inf
  %676 = vmax.xlane.f32.xlu0 %v675
  %v677 = vpop.xlane.xlu0 %676
  %v678 = vsel %vm39, %v668, -inf
  %679 = vmax.xlane.f32.xlu0 %v678
  %v680 = vpop.xlane.xlu0 %679
  %v681 = vsel %vm39, %v669, -inf
  %682 = vmax.xlane.f32.xlu0 %v681
  %v683 = vpop.xlane.xlu0 %682
  %v684 = vsel %vm39, %v670, -inf
  %685 = vmax.xlane.f32.xlu0 %v684
  %v686 = vpop.xlane.xlu0 %685
  %v687 = vsel %vm39, %v671, -inf
  %688 = vmax.xlane.f32.xlu0 %v687
  %v689 = vpop.xlane.xlu0 %688
  %v690 = vsel %vm39, %v672, -inf
  %691 = vmax.xlane.f32.xlu0 %v690
  %v692 = vpop.xlane.xlu0 %691
  %v693 = vsel %vm39, %v673, -inf
  %694 = vmax.xlane.f32.xlu0 %v693
  %v695 = vpop.xlane.xlu0 %694
  %v696 = vsel %vm39, %v674, -inf
  %697 = vmax.xlane.f32.xlu0 %v696
  %v698 = vpop.xlane.xlu0 %697
  %v699 = vsub.f32 %v667, %v677
  %v700 = vsub.f32 %v668, %v680
  %v701 = vsub.f32 %v669, %v683
  %v702 = vsub.f32 %v670, %v686
  %v703 = vsub.f32 %v671, %v689
  %v704 = vsub.f32 %v672, %v692
  %v705 = vsub.f32 %v673, %v695
  %v706 = vsub.f32 %v674, %v698
  %v707 = vmul.f32 %v699, 1.442695
  %v708 = vpow.pop %v707
  %v709 = vmul.f32 %v700, 1.442695
  %v710 = vpow.pop %v709
  %v711 = vmul.f32 %v701, 1.442695
  %v712 = vpow.pop %v711
  %v713 = vmul.f32 %v702, 1.442695
  %v714 = vpow.pop %v713
  %v715 = vmul.f32 %v703, 1.442695
  %v716 = vpow.pop %v715
  %v717 = vmul.f32 %v704, 1.442695
  %v718 = vpow.pop %v717
  %v719 = vmul.f32 %v705, 1.442695
  %v720 = vpow.pop %v719
  %v721 = vmul.f32 %v706, 1.442695
  %v722 = vpow.pop %v721
  %v723 = vsel %vm39, %v708, 0.0
  %724 = vadd.xlane.f32.xlu0 %v723
  %v725 = vpop.xlane.xlu0 %724
  %v726 = vsel %vm39, %v710, 0.0
  %727 = vadd.xlane.f32.xlu0 %v726
  %v728 = vpop.xlane.xlu0 %727
  %v729 = vsel %vm39, %v712, 0.0
  %730 = vadd.xlane.f32.xlu0 %v729
  %v731 = vpop.xlane.xlu0 %730
  %v732 = vsel %vm39, %v714, 0.0
  %733 = vadd.xlane.f32.xlu0 %v732
  %v734 = vpop.xlane.xlu0 %733
  %v735 = vsel %vm39, %v716, 0.0
  %736 = vadd.xlane.f32.xlu0 %v735
  %v737 = vpop.xlane.xlu0 %736
  %v738 = vsel %vm39, %v718, 0.0
  %739 = vadd.xlane.f32.xlu0 %v738
  %v740 = vpop.xlane.xlu0 %739
  %v741 = vsel %vm39, %v720, 0.0
  %742 = vadd.xlane.f32.xlu0 %v741
  %v743 = vpop.xlane.xlu0 %742
  %v744 = vsel %vm39, %v722, 0.0
  %745 = vadd.xlane.f32.xlu0 %v744
  %v746 = vpop.xlane.xlu0 %745
  %v747 = vrcp.pop %v725
  %v748 = vrcp.pop %v728
  %v749 = vrcp.pop %v731
  %v750 = vrcp.pop %v734
  %v751 = vrcp.pop %v737
  %v752 = vrcp.pop %v740
  %v753 = vrcp.pop %v743
  %v754 = vrcp.pop %v746
  %v755 = vmul.f32 %v708, %v747
  %v756 = vmul.f32 %v710, %v748
  %v757 = vmul.f32 %v712, %v749
  %v758 = vmul.f32 %v714, %v750
  %v759 = vmul.f32 %v716, %v751
  %v760 = vmul.f32 %v718, %v752
  %v761 = vmul.f32 %v720, %v753
  %v762 = vmul.f32 %v722, %v754
  %v764 = vsel %vm39, %v210, 0
  %v767 = vsel %vm39, %v755, 0
  %v770 = vsel %vm39, %v756, 0
  %772 = vmatprep.subr.mxu0 0.0
  %773 = vmatpush1.xpose.msra.mxu0 %v767
  %774 = vmatprep.subr.mxu0 0.0
  %775 = vmatpush1.xpose.msra.mxu0 %v770
  %776 = vmatprep.subr.mxu0 0.0
  %777 = vmatpush1.xpose.msra.mxu0 0.0
  %778 = vmatprep.subr.mxu0 0.0
  %779 = vmatpush1.xpose.msra.mxu0 0.0
  %780 = vmatprep.subr.mxu0 0.0
  %781 = vmatpush1.xpose.msra.mxu0 0.0
  %782 = vmatprep.subr.mxu0 0.0
  %783 = vmatpush1.xpose.msra.mxu0 0.0
  %784 = vmatprep.subr.mxu0 0.0
  %785 = vmatpush1.xpose.msra.mxu0 0.0
  %786 = vmatprep.subr.mxu0 0.0
  %787 = vmatpush1.xpose.msra.mxu0 0.0
  %788 = vmatprep.subr.mxu0 0.0
  %789 = vmatpush1.xpose.msra.mxu0 0.0
  %790 = vmatprep.subr.mxu0 0.0
  %791 = vmatpush1.xpose.msra.mxu0 0.0
  %792 = vmatprep.subr.mxu0 0.0
  %793 = vmatpush1.xpose.msra.mxu0 0.0
  %794 = vmatprep.subr.mxu0 0.0
  %795 = vmatpush1.xpose.msra.mxu0 0.0
  %796 = vmatprep.subr.mxu0 0.0
  %797 = vmatpush1.xpose.msra.mxu0 0.0
  %798 = vmatprep.subr.mxu0 0.0
  %799 = vmatpush1.xpose.msra.mxu0 0.0
  %800 = vmatprep.subr.mxu0 0.0
  %801 = vmatpush1.xpose.msra.mxu0 0.0
  %802 = vmatprep.subr.mxu0 0.0
  %803 = vmatpush1.xpose.msra.mxu0 0.0
  %804 = vmatprep.subr.mxu0 0.0
  %805 = vmatpush1.xpose.msra.mxu0 0.0
  %806 = vmatprep.subr.mxu0 0.0
  %807 = vmatpush1.xpose.msra.mxu0 0.0
  %808 = vmatprep.subr.mxu0 0.0
  %809 = vmatpush1.xpose.msra.mxu0 0.0
  %810 = vmatprep.subr.mxu0 0.0
  %811 = vmatpush1.xpose.msra.mxu0 0.0
  %812 = vmatprep.subr.mxu0 0.0
  %813 = vmatpush1.xpose.msra.mxu0 0.0
  %814 = vmatprep.subr.mxu0 0.0
  %815 = vmatpush1.xpose.msra.mxu0 0.0
  %816 = vmatprep.subr.mxu0 0.0
  %817 = vmatpush1.xpose.msra.mxu0 0.0
  %818 = vmatprep.subr.mxu0 0.0
  %819 = vmatpush1.xpose.msra.mxu0 0.0
  %820 = vmatprep.subr.mxu0 0.0
  %821 = vmatpush1.xpose.msra.mxu0 0.0
  %822 = vmatprep.subr.mxu0 0.0
  %823 = vmatpush1.xpose.msra.mxu0 0.0
  %824 = vmatprep.subr.mxu0 0.0
  %825 = vmatpush1.xpose.msra.mxu0 0.0
  %826 = vmatprep.subr.mxu0 0.0
  %827 = vmatpush1.xpose.msra.mxu0 0.0
  %828 = vmatprep.subr.mxu0 0.0
  %829 = vmatpush1.xpose.msra.mxu0 0.0
  %830 = vmatprep.subr.mxu0 0.0
  %831 = vmatpush1.xpose.msra.mxu0 0.0
  %832 = vmatprep.subr.mxu0 0.0
  %833 = vmatpush1.xpose.msra.mxu0 0.0
  %834 = vmatprep.subr.mxu0 0.0
  %835 = vmatpush1.xpose.msra.mxu0 0.0
  %836 = vmatprep.mubr.f32.mxu0 0.0
  %837 = vmatmul.mubr.f32.gmra.mrb[0].mxu0 %v764
  %v838 = vpop.f32.mrb[0].mxu0
  %v839 = vadd.f32 0.0, %v838
  %v840 = vpop.f32.mrb[0].mxu0
  %841 = vdwg.mxu0
  %v843 = vsel %vm39, %v211, 0
  %v846 = vsel %vm39, %v757, 0
  %v849 = vsel %vm39, %v758, 0
  %851 = vmatprep.subr.mxu0 0.0
  %852 = vmatpush1.xpose.msra.mxu0 %v846
  %853 = vmatprep.subr.mxu0 0.0
  %854 = vmatpush1.xpose.msra.mxu0 %v849
  %855 = vmatprep.subr.mxu0 0.0
  %856 = vmatpush1.xpose.msra.mxu0 0.0
  %857 = vmatprep.subr.mxu0 0.0
  %858 = vmatpush1.xpose.msra.mxu0 0.0
  %859 = vmatprep.subr.mxu0 0.0
  %860 = vmatpush1.xpose.msra.mxu0 0.0
  %861 = vmatprep.subr.mxu0 0.0
  %862 = vmatpush1.xpose.msra.mxu0 0.0
  %863 = vmatprep.subr.mxu0 0.0
  %864 = vmatpush1.xpose.msra.mxu0 0.0
  %865 = vmatprep.subr.mxu0 0.0
  %866 = vmatpush1.xpose.msra.mxu0 0.0
  %867 = vmatprep.subr.mxu0 0.0
  %868 = vmatpush1.xpose.msra.mxu0 0.0
  %869 = vmatprep.subr.mxu0 0.0
  %870 = vmatpush1.xpose.msra.mxu0 0.0
  %871 = vmatprep.subr.mxu0 0.0
  %872 = vmatpush1.xpose.msra.mxu0 0.0
  %873 = vmatprep.subr.mxu0 0.0
  %874 = vmatpush1.xpose.msra.mxu0 0.0
  %875 = vmatprep.subr.mxu0 0.0
  %876 = vmatpush1.xpose.msra.mxu0 0.0
  %877 = vmatprep.subr.mxu0 0.0
  %878 = vmatpush1.xpose.msra.mxu0 0.0
  %879 = vmatprep.subr.mxu0 0.0
  %880 = vmatpush1.xpose.msra.mxu0 0.0
  %881 = vmatprep.subr.mxu0 0.0
  %882 = vmatpush1.xpose.msra.mxu0 0.0
  %883 = vmatprep.subr.mxu0 0.0
  %884 = vmatpush1.xpose.msra.mxu0 0.0
  %885 = vmatprep.subr.mxu0 0.0
  %886 = vmatpush1.xpose.msra.mxu0 0.0
  %887 = vmatprep.subr.mxu0 0.0
  %888 = vmatpush1.xpose.msra.mxu0 0.0
  %889 = vmatprep.subr.mxu0 0.0
  %890 = vmatpush1.xpose.msra.mxu0 0.0
  %891 = vmatprep.subr.mxu0 0.0
  %892 = vmatpush1.xpose.msra.mxu0 0.0
  %893 = vmatprep.subr.mxu0 0.0
  %894 = vmatpush1.xpose.msra.mxu0 0.0
  %895 = vmatprep.subr.mxu0 0.0
  %896 = vmatpush1.xpose.msra.mxu0 0.0
  %897 = vmatprep.subr.mxu0 0.0
  %898 = vmatpush1.xpose.msra.mxu0 0.0
  %899 = vmatprep.subr.mxu0 0.0
  %900 = vmatpush1.xpose.msra.mxu0 0.0
  %901 = vmatprep.subr.mxu0 0.0
  %902 = vmatpush1.xpose.msra.mxu0 0.0
  %903 = vmatprep.subr.mxu0 0.0
  %904 = vmatpush1.xpose.msra.mxu0 0.0
  %905 = vmatprep.subr.mxu0 0.0
  %906 = vmatpush1.xpose.msra.mxu0 0.0
  %907 = vmatprep.subr.mxu0 0.0
  %908 = vmatpush1.xpose.msra.mxu0 0.0
  %909 = vmatprep.subr.mxu0 0.0
  %910 = vmatpush1.xpose.msra.mxu0 0.0
  %911 = vmatprep.subr.mxu0 0.0
  %912 = vmatpush1.xpose.msra.mxu0 0.0
  %913 = vmatprep.subr.mxu0 0.0
  %914 = vmatpush1.xpose.msra.mxu0 0.0
  %915 = vmatprep.mubr.f32.mxu0 0.0
  %916 = vmatmul.mubr.f32.gmra.mrb[0].mxu0 %v843
  %v917 = vpop.f32.mrb[0].mxu0
  %v918 = vadd.f32 0.0, %v917
  %v919 = vpop.f32.mrb[0].mxu0
  %920 = vdwg.mxu0
  %v922 = vsel %vm39, %v212, 0
  %v925 = vsel %vm39, %v759, 0
  %v928 = vsel %vm39, %v760, 0
  %930 = vmatprep.subr.mxu0 0.0
  %931 = vmatpush1.xpose.msra.mxu0 %v925
  %932 = vmatprep.subr.mxu0 0.0
  %933 = vmatpush1.xpose.msra.mxu0 %v928
  %934 = vmatprep.subr.mxu0 0.0
  %935 = vmatpush1.xpose.msra.mxu0 0.0
  %936 = vmatprep.subr.mxu0 0.0
  %937 = vmatpush1.xpose.msra.mxu0 0.0
  %938 = vmatprep.subr.mxu0 0.0
  %939 = vmatpush1.xpose.msra.mxu0 0.0
  %940 = vmatprep.subr.mxu0 0.0
  %941 = vmatpush1.xpose.msra.mxu0 0.0
  %942 = vmatprep.subr.mxu0 0.0
  %943 = vmatpush1.xpose.msra.mxu0 0.0
  %944 = vmatprep.subr.mxu0 0.0
  %945 = vmatpush1.xpose.msra.mxu0 0.0
  %946 = vmatprep.subr.mxu0 0.0
  %947 = vmatpush1.xpose.msra.mxu0 0.0
  %948 = vmatprep.subr.mxu0 0.0
  %949 = vmatpush1.xpose.msra.mxu0 0.0
  %950 = vmatprep.subr.mxu0 0.0
  %951 = vmatpush1.xpose.msra.mxu0 0.0
  %952 = vmatprep.subr.mxu0 0.0
  %953 = vmatpush1.xpose.msra.mxu0 0.0
  %954 = vmatprep.subr.mxu0 0.0
  %955 = vmatpush1.xpose.msra.mxu0 0.0
  %956 = vmatprep.subr.mxu0 0.0
  %957 = vmatpush1.xpose.msra.mxu0 0.0
  %958 = vmatprep.subr.mxu0 0.0
  %959 = vmatpush1.xpose.msra.mxu0 0.0
  %960 = vmatprep.subr.mxu0 0.0
  %961 = vmatpush1.xpose.msra.mxu0 0.0
  %962 = vmatprep.subr.mxu0 0.0
  %963 = vmatpush1.xpose.msra.mxu0 0.0
  %964 = vmatprep.subr.mxu0 0.0
  %965 = vmatpush1.xpose.msra.mxu0 0.0
  %966 = vmatprep.subr.mxu0 0.0
  %967 = vmatpush1.xpose.msra.mxu0 0.0
  %968 = vmatprep.subr.mxu0 0.0
  %969 = vmatpush1.xpose.msra.mxu0 0.0
  %970 = vmatprep.subr.mxu0 0.0
  %971 = vmatpush1.xpose.msra.mxu0 0.0
  %972 = vmatprep.subr.mxu0 0.0
  %973 = vmatpush1.xpose.msra.mxu0 0.0
  %974 = vmatprep.subr.mxu0 0.0
  %975 = vmatpush1.xpose.msra.mxu0 0.0
  %976 = vmatprep.subr.mxu0 0.0
  %977 = vmatpush1.xpose.msra.mxu0 0.0
  %978 = vmatprep.subr.mxu0 0.0
  %979 = vmatpush1.xpose.msra.mxu0 0.0
  %980 = vmatprep.subr.mxu0 0.0
  %981 = vmatpush1.xpose.msra.mxu0 0.0
  %982 = vmatprep.subr.mxu0 0.0
  %983 = vmatpush1.xpose.msra.mxu0 0.0
  %984 = vmatprep.subr.mxu0 0.0
  %985 = vmatpush1.xpose.msra.mxu0 0.0
  %986 = vmatprep.subr.mxu0 0.0
  %987 = vmatpush1.xpose.msra.mxu0 0.0
  %988 = vmatprep.subr.mxu0 0.0
  %989 = vmatpush1.xpose.msra.mxu0 0.0
  %990 = vmatprep.subr.mxu0 0.0
  %991 = vmatpush1.xpose.msra.mxu0 0.0
  %992 = vmatprep.subr.mxu0 0.0
  %993 = vmatpush1.xpose.msra.mxu0 0.0
  %994 = vmatprep.mubr.f32.mxu0 0.0
  %995 = vmatmul.mubr.f32.gmra.mrb[0].mxu0 %v922
  %v996 = vpop.f32.mrb[0].mxu0
  %v997 = vadd.f32 0.0, %v996
  %v998 = vpop.f32.mrb[0].mxu0
  %999 = vdwg.mxu0
  %v1001 = vsel %vm39, %v213, 0
  %v1004 = vsel %vm39, %v761, 0
  %v1007 = vsel %vm39, %v762, 0
  %1009 = vmatprep.subr.mxu0 0.0
  %1010 = vmatpush1.xpose.msra.mxu0 %v1004
  %1011 = vmatprep.subr.mxu0 0.0
  %1012 = vmatpush1.xpose.msra.mxu0 %v1007
  %1013 = vmatprep.subr.mxu0 0.0
  %1014 = vmatpush1.xpose.msra.mxu0 0.0
  %1015 = vmatprep.subr.mxu0 0.0
  %1016 = vmatpush1.xpose.msra.mxu0 0.0
  %1017 = vmatprep.subr.mxu0 0.0
  %1018 = vmatpush1.xpose.msra.mxu0 0.0
  %1019 = vmatprep.subr.mxu0 0.0
  %1020 = vmatpush1.xpose.msra.mxu0 0.0
  %1021 = vmatprep.subr.mxu0 0.0
  %1022 = vmatpush1.xpose.msra.mxu0 0.0
  %1023 = vmatprep.subr.mxu0 0.0
  %1024 = vmatpush1.xpose.msra.mxu0 0.0
  %1025 = vmatprep.subr.mxu0 0.0
  %1026 = vmatpush1.xpose.msra.mxu0 0.0
  %1027 = vmatprep.subr.mxu0 0.0
  %1028 = vmatpush1.xpose.msra.mxu0 0.0
  %1029 = vmatprep.subr.mxu0 0.0
  %1030 = vmatpush1.xpose.msra.mxu0 0.0
  %1031 = vmatprep.subr.mxu0 0.0
  %1032 = vmatpush1.xpose.msra.mxu0 0.0
  %1033 = vmatprep.subr.mxu0 0.0
  %1034 = vmatpush1.xpose.msra.mxu0 0.0
  %1035 = vmatprep.subr.mxu0 0.0
  %1036 = vmatpush1.xpose.msra.mxu0 0.0
  %1037 = vmatprep.subr.mxu0 0.0
  %1038 = vmatpush1.xpose.msra.mxu0 0.0
  %1039 = vmatprep.subr.mxu0 0.0
  %1040 = vmatpush1.xpose.msra.mxu0 0.0
  %1041 = vmatprep.subr.mxu0 0.0
  %1042 = vmatpush1.xpose.msra.mxu0 0.0
  %1043 = vmatprep.subr.mxu0 0.0
  %1044 = vmatpush1.xpose.msra.mxu0 0.0
  %1045 = vmatprep.subr.mxu0 0.0
  %1046 = vmatpush1.xpose.msra.mxu0 0.0
  %1047 = vmatprep.subr.mxu0 0.0
  %1048 = vmatpush1.xpose.msra.mxu0 0.0
  %1049 = vmatprep.subr.mxu0 0.0
  %1050 = vmatpush1.xpose.msra.mxu0 0.0
  %1051 = vmatprep.subr.mxu0 0.0
  %1052 = vmatpush1.xpose.msra.mxu0 0.0
  %1053 = vmatprep.subr.mxu0 0.0
  %1054 = vmatpush1.xpose.msra.mxu0 0.0
  %1055 = vmatprep.subr.mxu0 0.0
  %1056 = vmatpush1.xpose.msra.mxu0 0.0
  %1057 = vmatprep.subr.mxu0 0.0
  %1058 = vmatpush1.xpose.msra.mxu0 0.0
  %1059 = vmatprep.subr.mxu0 0.0
  %1060 = vmatpush1.xpose.msra.mxu0 0.0
  %1061 = vmatprep.subr.mxu0 0.0
  %1062 = vmatpush1.xpose.msra.mxu0 0.0
  %1063 = vmatprep.subr.mxu0 0.0
  %1064 = vmatpush1.xpose.msra.mxu0 0.0
  %1065 = vmatprep.subr.mxu0 0.0
  %1066 = vmatpush1.xpose.msra.mxu0 0.0
  %1067 = vmatprep.subr.mxu0 0.0
  %1068 = vmatpush1.xpose.msra.mxu0 0.0
  %1069 = vmatprep.subr.mxu0 0.0
  %1070 = vmatpush1.xpose.msra.mxu0 0.0
  %1071 = vmatprep.subr.mxu0 0.0
  %1072 = vmatpush1.xpose.msra.mxu0 0.0
  %1073 = vmatprep.mubr.f32.mxu0 0.0
  %1074 = vmatmul.mubr.f32.gmra.mrb[0].mxu0 %v1001
  %v1075 = vpop.f32.mrb[0].mxu0
  %v1076 = vadd.f32 0.0, %v1075
  %v1077 = vpop.f32.mrb[0].mxu0
  %1078 = vdwg.mxu0
  %1083 = vrot.lane.b32.xlu0 %v152, 112
  %v1084 = vpop.permute.xlu0 %1083
  %1085 = vrot.lane.b32.xlu0 %v157, 112
  %v1086 = vpop.permute.xlu0 %1085
  %1087 = vrot.lane.b32.xlu0 %v162, 112
  %v1088 = vpop.permute.xlu0 %1087
  %1089 = vrot.lane.b32.xlu0 %v167, 112
  %v1090 = vpop.permute.xlu0 %1089
  %1095 = vxpose.xlu0.b32.start [1/16] %v1084, 128
  %1096 = vxpose.xlu0.b32.cont [2/16] 0.0, 128
  %1097 = vxpose.xlu0.b32.cont [3/16] 0.0, 128
  %1098 = vxpose.xlu0.b32.cont [4/16] 0.0, 128
  %1099 = vxpose.xlu0.b32.cont [5/16] 0.0, 128
  %1100 = vxpose.xlu0.b32.cont [6/16] 0.0, 128
  %1101 = vxpose.xlu0.b32.cont [7/16] 0.0, 128
  %1102 = vxpose.xlu0.b32.cont [8/16] 0.0, 128
  %1103 = vxpose.xlu0.b32.cont [9/16] 0.0, 128
  %1104 = vxpose.xlu0.b32.cont [10/16] 0.0, 128
  %1105 = vxpose.xlu0.b32.cont [11/16] 0.0, 128
  %1106 = vxpose.xlu0.b32.cont [12/16] 0.0, 128
  %1107 = vxpose.xlu0.b32.cont [13/16] 0.0, 128
  %1108 = vxpose.xlu0.b32.cont [14/16] 0.0, 128
  %1109 = vxpose.xlu0.b32.cont [15/16] 0.0, 128
  %1110 = vxpose.xlu0.b32.end [16/16] 0.0, 128
  %v1111 = vpop.trf.xlu0
  %v1112 = vpop.trf.xlu0
  %v1113 = vpop.trf.xlu0
  %v1114 = vpop.trf.xlu0
  %v1115 = vpop.trf.xlu0
  %v1116 = vpop.trf.xlu0
  %v1117 = vpop.trf.xlu0
  %v1118 = vpop.trf.xlu0
  %v1119 = vpop.trf.xlu0
  %v1120 = vpop.trf.xlu0
  %v1121 = vpop.trf.xlu0
  %v1122 = vpop.trf.xlu0
  %v1123 = vpop.trf.xlu0
  %v1124 = vpop.trf.xlu0
  %v1125 = vpop.trf.xlu0
  %v1126 = vpop.trf.xlu0
  %1127 = vxpose.xlu0.b32.start [1/16] %v1086, 128
  %1128 = vxpose.xlu0.b32.cont [2/16] 0.0, 128
  %1129 = vxpose.xlu0.b32.cont [3/16] 0.0, 128
  %1130 = vxpose.xlu0.b32.cont [4/16] 0.0, 128
  %1131 = vxpose.xlu0.b32.cont [5/16] 0.0, 128
  %1132 = vxpose.xlu0.b32.cont [6/16] 0.0, 128
  %1133 = vxpose.xlu0.b32.cont [7/16] 0.0, 128
  %1134 = vxpose.xlu0.b32.cont [8/16] 0.0, 128
  %1135 = vxpose.xlu0.b32.cont [9/16] 0.0, 128
  %1136 = vxpose.xlu0.b32.cont [10/16] 0.0, 128
  %1137 = vxpose.xlu0.b32.cont [11/16] 0.0, 128
  %1138 = vxpose.xlu0.b32.cont [12/16] 0.0, 128
  %1139 = vxpose.xlu0.b32.cont [13/16] 0.0, 128
  %1140 = vxpose.xlu0.b32.cont [14/16] 0.0, 128
  %1141 = vxpose.xlu0.b32.cont [15/16] 0.0, 128
  %1142 = vxpose.xlu0.b32.end [16/16] 0.0, 128
  %v1143 = vpop.trf.xlu0
  %v1144 = vpop.trf.xlu0
  %v1145 = vpop.trf.xlu0
  %v1146 = vpop.trf.xlu0
  %v1147 = vpop.trf.xlu0
  %v1148 = vpop.trf.xlu0
  %v1149 = vpop.trf.xlu0
  %v1150 = vpop.trf.xlu0
  %v1151 = vpop.trf.xlu0
  %v1152 = vpop.trf.xlu0
  %v1153 = vpop.trf.xlu0
  %v1154 = vpop.trf.xlu0
  %v1155 = vpop.trf.xlu0
  %v1156 = vpop.trf.xlu0
  %v1157 = vpop.trf.xlu0
  %v1158 = vpop.trf.xlu0
  %1159 = vxpose.xlu0.b32.start [1/16] %v1088, 128
  %1160 = vxpose.xlu0.b32.cont [2/16] 0.0, 128
  %1161 = vxpose.xlu0.b32.cont [3/16] 0.0, 128
  %1162 = vxpose.xlu0.b32.cont [4/16] 0.0, 128
  %1163 = vxpose.xlu0.b32.cont [5/16] 0.0, 128
  %1164 = vxpose.xlu0.b32.cont [6/16] 0.0, 128
  %1165 = vxpose.xlu0.b32.cont [7/16] 0.0, 128
  %1166 = vxpose.xlu0.b32.cont [8/16] 0.0, 128
  %1167 = vxpose.xlu0.b32.cont [9/16] 0.0, 128
  %1168 = vxpose.xlu0.b32.cont [10/16] 0.0, 128
  %1169 = vxpose.xlu0.b32.cont [11/16] 0.0, 128
  %1170 = vxpose.xlu0.b32.cont [12/16] 0.0, 128
  %1171 = vxpose.xlu0.b32.cont [13/16] 0.0, 128
  %1172 = vxpose.xlu0.b32.cont [14/16] 0.0, 128
  %1173 = vxpose.xlu0.b32.cont [15/16] 0.0, 128
  %1174 = vxpose.xlu0.b32.end [16/16] 0.0, 128
  %v1175 = vpop.trf.xlu0
  %v1176 = vpop.trf.xlu0
  %v1177 = vpop.trf.xlu0
  %v1178 = vpop.trf.xlu0
  %v1179 = vpop.trf.xlu0
  %v1180 = vpop.trf.xlu0
  %v1181 = vpop.trf.xlu0
  %v1182 = vpop.trf.xlu0
  %v1183 = vpop.trf.xlu0
  %v1184 = vpop.trf.xlu0
  %v1185 = vpop.trf.xlu0
  %v1186 = vpop.trf.xlu0
  %v1187 = vpop.trf.xlu0
  %v1188 = vpop.trf.xlu0
  %v1189 = vpop.trf.xlu0
  %v1190 = vpop.trf.xlu0
  %1191 = vxpose.xlu0.b32.start [1/16] %v1090, 128
  %1192 = vxpose.xlu0.b32.cont [2/16] 0.0, 128
  %1193 = vxpose.xlu0.b32.cont [3/16] 0.0, 128
  %1194 = vxpose.xlu0.b32.cont [4/16] 0.0, 128
  %1195 = vxpose.xlu0.b32.cont [5/16] 0.0, 128
  %1196 = vxpose.xlu0.b32.cont [6/16] 0.0, 128
  %1197 = vxpose.xlu0.b32.cont [7/16] 0.0, 128
  %1198 = vxpose.xlu0.b32.cont [8/16] 0.0, 128
  %1199 = vxpose.xlu0.b32.cont [9/16] 0.0, 128
  %1200 = vxpose.xlu0.b32.cont [10/16] 0.0, 128
  %1201 = vxpose.xlu0.b32.cont [11/16] 0.0, 128
  %1202 = vxpose.xlu0.b32.cont [12/16] 0.0, 128
  %1203 = vxpose.xlu0.b32.cont [13/16] 0.0, 128
  %1204 = vxpose.xlu0.b32.cont [14/16] 0.0, 128
  %1205 = vxpose.xlu0.b32.cont [15/16] 0.0, 128
  %1206 = vxpose.xlu0.b32.end [16/16] 0.0, 128
  %v1207 = vpop.trf.xlu0
  %v1208 = vpop.trf.xlu0
  %v1209 = vpop.trf.xlu0
  %v1210 = vpop.trf.xlu0
  %v1211 = vpop.trf.xlu0
  %v1212 = vpop.trf.xlu0
  %v1213 = vpop.trf.xlu0
  %v1214 = vpop.trf.xlu0
  %v1215 = vpop.trf.xlu0
  %v1216 = vpop.trf.xlu0
  %v1217 = vpop.trf.xlu0
  %v1218 = vpop.trf.xlu0
  %v1219 = vpop.trf.xlu0
  %v1220 = vpop.trf.xlu0
  %v1221 = vpop.trf.xlu0
  %v1222 = vpop.trf.xlu0
  %v1224 = vsel %vm342, %v1111, 0
  %v1227 = vsel %vm342, %v1112, 0
  %1229 = vmatprep.subr.mxu0 0.0
  %1230 = vmatpush1.xpose.msra.mxu0 %v1224
  %1231 = vmatprep.subr.mxu0 0.0
  %1232 = vmatpush1.xpose.msra.mxu0 %v1227
  %1233 = vmatprep.subr.mxu0 0.0
  %1234 = vmatpush1.xpose.msra.mxu0 0.0
  %1235 = vmatprep.subr.mxu0 0.0
  %1236 = vmatpush1.xpose.msra.mxu0 0.0
  %1237 = vmatprep.subr.mxu0 0.0
  %1238 = vmatpush1.xpose.msra.mxu0 0.0
  %1239 = vmatprep.subr.mxu0 0.0
  %1240 = vmatpush1.xpose.msra.mxu0 0.0
  %1241 = vmatprep.subr.mxu0 0.0
  %1242 = vmatpush1.xpose.msra.mxu0 0.0
  %1243 = vmatprep.subr.mxu0 0.0
  %1244 = vmatpush1.xpose.msra.mxu0 0.0
  %1245 = vmatprep.subr.mxu0 0.0
  %1246 = vmatpush1.xpose.msra.mxu0 0.0
  %1247 = vmatprep.subr.mxu0 0.0
  %1248 = vmatpush1.xpose.msra.mxu0 0.0
  %1249 = vmatprep.subr.mxu0 0.0
  %1250 = vmatpush1.xpose.msra.mxu0 0.0
  %1251 = vmatprep.subr.mxu0 0.0
  %1252 = vmatpush1.xpose.msra.mxu0 0.0
  %1253 = vmatprep.subr.mxu0 0.0
  %1254 = vmatpush1.xpose.msra.mxu0 0.0
  %1255 = vmatprep.subr.mxu0 0.0
  %1256 = vmatpush1.xpose.msra.mxu0 0.0
  %1257 = vmatprep.subr.mxu0 0.0
  %1258 = vmatpush1.xpose.msra.mxu0 0.0
  %1259 = vmatprep.subr.mxu0 0.0
  %1260 = vmatpush1.xpose.msra.mxu0 0.0
  %1261 = vmatprep.subr.mxu0 0.0
  %1262 = vmatpush1.xpose.msra.mxu0 0.0
  %1263 = vmatprep.subr.mxu0 0.0
  %1264 = vmatpush1.xpose.msra.mxu0 0.0
  %1265 = vmatprep.subr.mxu0 0.0
  %1266 = vmatpush1.xpose.msra.mxu0 0.0
  %1267 = vmatprep.subr.mxu0 0.0
  %1268 = vmatpush1.xpose.msra.mxu0 0.0
  %1269 = vmatprep.subr.mxu0 0.0
  %1270 = vmatpush1.xpose.msra.mxu0 0.0
  %1271 = vmatprep.subr.mxu0 0.0
  %1272 = vmatpush1.xpose.msra.mxu0 0.0
  %1273 = vmatprep.subr.mxu0 0.0
  %1274 = vmatpush1.xpose.msra.mxu0 0.0
  %1275 = vmatprep.subr.mxu0 0.0
  %1276 = vmatpush1.xpose.msra.mxu0 0.0
  %1277 = vmatprep.subr.mxu0 0.0
  %1278 = vmatpush1.xpose.msra.mxu0 0.0
  %1279 = vmatprep.subr.mxu0 0.0
  %1280 = vmatpush1.xpose.msra.mxu0 0.0
  %1281 = vmatprep.subr.mxu0 0.0
  %1282 = vmatpush1.xpose.msra.mxu0 0.0
  %1283 = vmatprep.subr.mxu0 0.0
  %1284 = vmatpush1.xpose.msra.mxu0 0.0
  %1285 = vmatprep.subr.mxu0 0.0
  %1286 = vmatpush1.xpose.msra.mxu0 0.0
  %1287 = vmatprep.subr.mxu0 0.0
  %1288 = vmatpush1.xpose.msra.mxu0 0.0
  %1289 = vmatprep.subr.mxu0 0.0
  %1290 = vmatpush1.xpose.msra.mxu0 0.0
  %1291 = vmatprep.subr.mxu0 0.0
  %1292 = vmatpush1.xpose.msra.mxu0 0.0
  %1293 = vmatprep.mubr.f32.mxu0 0.0
  %1294 = vmatmul.mubr.f32.gmra.mrb[0].mxu0 %v1224
  %v1295 = vpop.f32.mrb[0].mxu0
  %v1296 = vadd.f32 0.0, %v1295
  %v1297 = vpop.f32.mrb[0].mxu0
  %1298 = vmatprep.mubr.f32.mxu0 0.0
  %1299 = vmatmul.mubr.f32.gmra.mrb[0].mxu0 %v1227
  %v1300 = vpop.f32.mrb[0].mxu0
  %v1301 = vadd.f32 0.0, %v1300
  %v1302 = vpop.f32.mrb[0].mxu0
  %1303 = vdwg.mxu0
  %v1305 = vsel %vm342, %v1143, 0
  %v1308 = vsel %vm342, %v1144, 0
  %1310 = vmatprep.subr.mxu0 0.0
  %1311 = vmatpush1.xpose.msra.mxu0 %v1305
  %1312 = vmatprep.subr.mxu0 0.0
  %1313 = vmatpush1.xpose.msra.mxu0 %v1308
  %1314 = vmatprep.subr.mxu0 0.0
  %1315 = vmatpush1.xpose.msra.mxu0 0.0
  %1316 = vmatprep.subr.mxu0 0.0
  %1317 = vmatpush1.xpose.msra.mxu0 0.0
  %1318 = vmatprep.subr.mxu0 0.0
  %1319 = vmatpush1.xpose.msra.mxu0 0.0
  %1320 = vmatprep.subr.mxu0 0.0
  %1321 = vmatpush1.xpose.msra.mxu0 0.0
  %1322 = vmatprep.subr.mxu0 0.0
  %1323 = vmatpush1.xpose.msra.mxu0 0.0
  %1324 = vmatprep.subr.mxu0 0.0
  %1325 = vmatpush1.xpose.msra.mxu0 0.0
  %1326 = vmatprep.subr.mxu0 0.0
  %1327 = vmatpush1.xpose.msra.mxu0 0.0
  %1328 = vmatprep.subr.mxu0 0.0
  %1329 = vmatpush1.xpose.msra.mxu0 0.0
  %1330 = vmatprep.subr.mxu0 0.0
  %1331 = vmatpush1.xpose.msra.mxu0 0.0
  %1332 = vmatprep.subr.mxu0 0.0
  %1333 = vmatpush1.xpose.msra.mxu0 0.0
  %1334 = vmatprep.subr.mxu0 0.0
  %1335 = vmatpush1.xpose.msra.mxu0 0.0
  %1336 = vmatprep.subr.mxu0 0.0
  %1337 = vmatpush1.xpose.msra.mxu0 0.0
  %1338 = vmatprep.subr.mxu0 0.0
  %1339 = vmatpush1.xpose.msra.mxu0 0.0
  %1340 = vmatprep.subr.mxu0 0.0
  %1341 = vmatpush1.xpose.msra.mxu0 0.0
  %1342 = vmatprep.subr.mxu0 0.0
  %1343 = vmatpush1.xpose.msra.mxu0 0.0
  %1344 = vmatprep.subr.mxu0 0.0
  %1345 = vmatpush1.xpose.msra.mxu0 0.0
  %1346 = vmatprep.subr.mxu0 0.0
  %1347 = vmatpush1.xpose.msra.mxu0 0.0
  %1348 = vmatprep.subr.mxu0 0.0
  %1349 = vmatpush1.xpose.msra.mxu0 0.0
  %1350 = vmatprep.subr.mxu0 0.0
  %1351 = vmatpush1.xpose.msra.mxu0 0.0
  %1352 = vmatprep.subr.mxu0 0.0
  %1353 = vmatpush1.xpose.msra.mxu0 0.0
  %1354 = vmatprep.subr.mxu0 0.0
  %1355 = vmatpush1.xpose.msra.mxu0 0.0
  %1356 = vmatprep.subr.mxu0 0.0
  %1357 = vmatpush1.xpose.msra.mxu0 0.0
  %1358 = vmatprep.subr.mxu0 0.0
  %1359 = vmatpush1.xpose.msra.mxu0 0.0
  %1360 = vmatprep.subr.mxu0 0.0
  %1361 = vmatpush1.xpose.msra.mxu0 0.0
  %1362 = vmatprep.subr.mxu0 0.0
  %1363 = vmatpush1.xpose.msra.mxu0 0.0
  %1364 = vmatprep.subr.mxu0 0.0
  %1365 = vmatpush1.xpose.msra.mxu0 0.0
  %1366 = vmatprep.subr.mxu0 0.0
  %1367 = vmatpush1.xpose.msra.mxu0 0.0
  %1368 = vmatprep.subr.mxu0 0.0
  %1369 = vmatpush1.xpose.msra.mxu0 0.0
  %1370 = vmatprep.subr.mxu0 0.0
  %1371 = vmatpush1.xpose.msra.mxu0 0.0
  %1372 = vmatprep.subr.mxu0 0.0
  %1373 = vmatpush1.xpose.msra.mxu0 0.0
  %1374 = vmatprep.mubr.f32.mxu0 0.0
  %1375 = vmatmul.mubr.f32.gmra.mrb[0].mxu0 %v1305
  %v1376 = vpop.f32.mrb[0].mxu0
  %v1377 = vadd.f32 0.0, %v1376
  %v1378 = vpop.f32.mrb[0].mxu0
  %1379 = vmatprep.mubr.f32.mxu0 0.0
  %1380 = vmatmul.mubr.f32.gmra.mrb[0].mxu0 %v1308
  %v1381 = vpop.f32.mrb[0].mxu0
  %v1382 = vadd.f32 0.0, %v1381
  %v1383 = vpop.f32.mrb[0].mxu0
  %1384 = vdwg.mxu0
  %v1386 = vsel %vm342, %v1175, 0
  %v1389 = vsel %vm342, %v1176, 0
  %1391 = vmatprep.subr.mxu0 0.0
  %1392 = vmatpush1.xpose.msra.mxu0 %v1386
  %1393 = vmatprep.subr.mxu0 0.0
  %1394 = vmatpush1.xpose.msra.mxu0 %v1389
  %1395 = vmatprep.subr.mxu0 0.0
  %1396 = vmatpush1.xpose.msra.mxu0 0.0
  %1397 = vmatprep.subr.mxu0 0.0
  %1398 = vmatpush1.xpose.msra.mxu0 0.0
  %1399 = vmatprep.subr.mxu0 0.0
  %1400 = vmatpush1.xpose.msra.mxu0 0.0
  %1401 = vmatprep.subr.mxu0 0.0
  %1402 = vmatpush1.xpose.msra.mxu0 0.0
  %1403 = vmatprep.subr.mxu0 0.0
  %1404 = vmatpush1.xpose.msra.mxu0 0.0
  %1405 = vmatprep.subr.mxu0 0.0
  %1406 = vmatpush1.xpose.msra.mxu0 0.0
  %1407 = vmatprep.subr.mxu0 0.0
  %1408 = vmatpush1.xpose.msra.mxu0 0.0
  %1409 = vmatprep.subr.mxu0 0.0
  %1410 = vmatpush1.xpose.msra.mxu0 0.0
  %1411 = vmatprep.subr.mxu0 0.0
  %1412 = vmatpush1.xpose.msra.mxu0 0.0
  %1413 = vmatprep.subr.mxu0 0.0
  %1414 = vmatpush1.xpose.msra.mxu0 0.0
  %1415 = vmatprep.subr.mxu0 0.0
  %1416 = vmatpush1.xpose.msra.mxu0 0.0
  %1417 = vmatprep.subr.mxu0 0.0
  %1418 = vmatpush1.xpose.msra.mxu0 0.0
  %1419 = vmatprep.subr.mxu0 0.0
  %1420 = vmatpush1.xpose.msra.mxu0 0.0
  %1421 = vmatprep.subr.mxu0 0.0
  %1422 = vmatpush1.xpose.msra.mxu0 0.0
  %1423 = vmatprep.subr.mxu0 0.0
  %1424 = vmatpush1.xpose.msra.mxu0 0.0
  %1425 = vmatprep.subr.mxu0 0.0
  %1426 = vmatpush1.xpose.msra.mxu0 0.0
  %1427 = vmatprep.subr.mxu0 0.0
  %1428 = vmatpush1.xpose.msra.mxu0 0.0
  %1429 = vmatprep.subr.mxu0 0.0
  %1430 = vmatpush1.xpose.msra.mxu0 0.0
  %1431 = vmatprep.subr.mxu0 0.0
  %1432 = vmatpush1.xpose.msra.mxu0 0.0
  %1433 = vmatprep.subr.mxu0 0.0
  %1434 = vmatpush1.xpose.msra.mxu0 0.0
  %1435 = vmatprep.subr.mxu0 0.0
  %1436 = vmatpush1.xpose.msra.mxu0 0.0
  %1437 = vmatprep.subr.mxu0 0.0
  %1438 = vmatpush1.xpose.msra.mxu0 0.0
  %1439 = vmatprep.subr.mxu0 0.0
  %1440 = vmatpush1.xpose.msra.mxu0 0.0
  %1441 = vmatprep.subr.mxu0 0.0
  %1442 = vmatpush1.xpose.msra.mxu0 0.0
  %1443 = vmatprep.subr.mxu0 0.0
  %1444 = vmatpush1.xpose.msra.mxu0 0.0
  %1445 = vmatprep.subr.mxu0 0.0
  %1446 = vmatpush1.xpose.msra.mxu0 0.0
  %1447 = vmatprep.subr.mxu0 0.0
  %1448 = vmatpush1.xpose.msra.mxu0 0.0
  %1449 = vmatprep.subr.mxu0 0.0
  %1450 = vmatpush1.xpose.msra.mxu0 0.0
  %1451 = vmatprep.subr.mxu0 0.0
  %1452 = vmatpush1.xpose.msra.mxu0 0.0
  %1453 = vmatprep.subr.mxu0 0.0
  %1454 = vmatpush1.xpose.msra.mxu0 0.0
  %1455 = vmatprep.mubr.f32.mxu0 0.0
  %1456 = vmatmul.mubr.f32.gmra.mrb[0].mxu0 %v1386
  %v1457 = vpop.f32.mrb[0].mxu0
  %v1458 = vadd.f32 0.0, %v1457
  %v1459 = vpop.f32.mrb[0].mxu0
  %1460 = vmatprep.mubr.f32.mxu0 0.0
  %1461 = vmatmul.mubr.f32.gmra.mrb[0].mxu0 %v1389
  %v1462 = vpop.f32.mrb[0].mxu0
  %v1463 = vadd.f32 0.0, %v1462
  %v1464 = vpop.f32.mrb[0].mxu0
  %1465 = vdwg.mxu0
  %v1467 = vsel %vm342, %v1207, 0
  %v1470 = vsel %vm342, %v1208, 0
  %1472 = vmatprep.subr.mxu0 0.0
  %1473 = vmatpush1.xpose.msra.mxu0 %v1467
  %1474 = vmatprep.subr.mxu0 0.0
  %1475 = vmatpush1.xpose.msra.mxu0 %v1470
  %1476 = vmatprep.subr.mxu0 0.0
  %1477 = vmatpush1.xpose.msra.mxu0 0.0
  %1478 = vmatprep.subr.mxu0 0.0
  %1479 = vmatpush1.xpose.msra.mxu0 0.0
  %1480 = vmatprep.subr.mxu0 0.0
  %1481 = vmatpush1.xpose.msra.mxu0 0.0
  %1482 = vmatprep.subr.mxu0 0.0
  %1483 = vmatpush1.xpose.msra.mxu0 0.0
  %1484 = vmatprep.subr.mxu0 0.0
  %1485 = vmatpush1.xpose.msra.mxu0 0.0
  %1486 = vmatprep.subr.mxu0 0.0
  %1487 = vmatpush1.xpose.msra.mxu0 0.0
  %1488 = vmatprep.subr.mxu0 0.0
  %1489 = vmatpush1.xpose.msra.mxu0 0.0
  %1490 = vmatprep.subr.mxu0 0.0
  %1491 = vmatpush1.xpose.msra.mxu0 0.0
  %1492 = vmatprep.subr.mxu0 0.0
  %1493 = vmatpush1.xpose.msra.mxu0 0.0
  %1494 = vmatprep.subr.mxu0 0.0
  %1495 = vmatpush1.xpose.msra.mxu0 0.0
  %1496 = vmatprep.subr.mxu0 0.0
  %1497 = vmatpush1.xpose.msra.mxu0 0.0
  %1498 = vmatprep.subr.mxu0 0.0
  %1499 = vmatpush1.xpose.msra.mxu0 0.0
  %1500 = vmatprep.subr.mxu0 0.0
  %1501 = vmatpush1.xpose.msra.mxu0 0.0
  %1502 = vmatprep.subr.mxu0 0.0
  %1503 = vmatpush1.xpose.msra.mxu0 0.0
  %1504 = vmatprep.subr.mxu0 0.0
  %1505 = vmatpush1.xpose.msra.mxu0 0.0
  %1506 = vmatprep.subr.mxu0 0.0
  %1507 = vmatpush1.xpose.msra.mxu0 0.0
  %1508 = vmatprep.subr.mxu0 0.0
  %1509 = vmatpush1.xpose.msra.mxu0 0.0
  %1510 = vmatprep.subr.mxu0 0.0
  %1511 = vmatpush1.xpose.msra.mxu0 0.0
  %1512 = vmatprep.subr.mxu0 0.0
  %1513 = vmatpush1.xpose.msra.mxu0 0.0
  %1514 = vmatprep.subr.mxu0 0.0
  %1515 = vmatpush1.xpose.msra.mxu0 0.0
  %1516 = vmatprep.subr.mxu0 0.0
  %1517 = vmatpush1.xpose.msra.mxu0 0.0
  %1518 = vmatprep.subr.mxu0 0.0
  %1519 = vmatpush1.xpose.msra.mxu0 0.0
  %1520 = vmatprep.subr.mxu0 0.0
  %1521 = vmatpush1.xpose.msra.mxu0 0.0
  %1522 = vmatprep.subr.mxu0 0.0
  %1523 = vmatpush1.xpose.msra.mxu0 0.0
  %1524 = vmatprep.subr.mxu0 0.0
  %1525 = vmatpush1.xpose.msra.mxu0 0.0
  %1526 = vmatprep.subr.mxu0 0.0
  %1527 = vmatpush1.xpose.msra.mxu0 0.0
  %1528 = vmatprep.subr.mxu0 0.0
  %1529 = vmatpush1.xpose.msra.mxu0 0.0
  %1530 = vmatprep.subr.mxu0 0.0
  %1531 = vmatpush1.xpose.msra.mxu0 0.0
  %1532 = vmatprep.subr.mxu0 0.0
  %1533 = vmatpush1.xpose.msra.mxu0 0.0
  %1534 = vmatprep.subr.mxu0 0.0
  %1535 = vmatpush1.xpose.msra.mxu0 0.0
  %1536 = vmatprep.mubr.f32.mxu0 0.0
  %1537 = vmatmul.mubr.f32.gmra.mrb[0].mxu0 %v1467
  %v1538 = vpop.f32.mrb[0].mxu0
  %v1539 = vadd.f32 0.0, %v1538
  %v1540 = vpop.f32.mrb[0].mxu0
  %1541 = vmatprep.mubr.f32.mxu0 0.0
  %1542 = vmatmul.mubr.f32.gmra.mrb[0].mxu0 %v1470
  %v1543 = vpop.f32.mrb[0].mxu0
  %v1544 = vadd.f32 0.0, %v1543
  %v1545 = vpop.f32.mrb[0].mxu0
  %1546 = vdwg.mxu0
  %v1547 = vmul.f32 %v1296, 0.35355338
  %v1548 = vmul.f32 %v1301, 0.35355338
  %v1549 = vmul.f32 %v1377, 0.35355338
  %v1550 = vmul.f32 %v1382, 0.35355338
  %v1551 = vmul.f32 %v1458, 0.35355338
  %v1552 = vmul.f32 %v1463, 0.35355338
  %v1553 = vmul.f32 %v1539, 0.35355338
  %v1554 = vmul.f32 %v1544, 0.35355338
  %v1555 = vsel %vm39, %v1547, -inf
  %1556 = vmax.xlane.f32.xlu0 %v1555
  %v1557 = vpop.xlane.xlu0 %1556
  %v1558 = vsel %vm39, %v1548, -inf
  %1559 = vmax.xlane.f32.xlu0 %v1558
  %v1560 = vpop.xlane.xlu0 %1559
  %v1561 = vsel %vm39, %v1549, -inf
  %1562 = vmax.xlane.f32.xlu0 %v1561
  %v1563 = vpop.xlane.xlu0 %1562
  %v1564 = vsel %vm39, %v1550, -inf
  %1565 = vmax.xlane.f32.xlu0 %v1564
  %v1566 = vpop.xlane.xlu0 %1565
  %v1567 = vsel %vm39, %v1551, -inf
  %1568 = vmax.xlane.f32.xlu0 %v1567
  %v1569 = vpop.xlane.xlu0 %1568
  %v1570 = vsel %vm39, %v1552, -inf
  %1571 = vmax.xlane.f32.xlu0 %v1570
  %v1572 = vpop.xlane.xlu0 %1571
  %v1573 = vsel %vm39, %v1553, -inf
  %1574 = vmax.xlane.f32.xlu0 %v1573
  %v1575 = vpop.xlane.xlu0 %1574
  %v1576 = vsel %vm39, %v1554, -inf
  %1577 = vmax.xlane.f32.xlu0 %v1576
  %v1578 = vpop.xlane.xlu0 %1577
  %v1579 = vsub.f32 %v1547, %v1557
  %v1580 = vsub.f32 %v1548, %v1560
  %v1581 = vsub.f32 %v1549, %v1563
  %v1582 = vsub.f32 %v1550, %v1566
  %v1583 = vsub.f32 %v1551, %v1569
  %v1584 = vsub.f32 %v1552, %v1572
  %v1585 = vsub.f32 %v1553, %v1575
  %v1586 = vsub.f32 %v1554, %v1578
  %v1587 = vmul.f32 %v1579, 1.442695
  %v1588 = vpow.pop %v1587
  %v1589 = vmul.f32 %v1580, 1.442695
  %v1590 = vpow.pop %v1589
  %v1591 = vmul.f32 %v1581, 1.442695
  %v1592 = vpow.pop %v1591
  %v1593 = vmul.f32 %v1582, 1.442695
  %v1594 = vpow.pop %v1593
  %v1595 = vmul.f32 %v1583, 1.442695
  %v1596 = vpow.pop %v1595
  %v1597 = vmul.f32 %v1584, 1.442695
  %v1598 = vpow.pop %v1597
  %v1599 = vmul.f32 %v1585, 1.442695
  %v1600 = vpow.pop %v1599
  %v1601 = vmul.f32 %v1586, 1.442695
  %v1602 = vpow.pop %v1601
  %v1603 = vsel %vm39, %v1588, 0.0
  %1604 = vadd.xlane.f32.xlu0 %v1603
  %v1605 = vpop.xlane.xlu0 %1604
  %v1606 = vsel %vm39, %v1590, 0.0
  %1607 = vadd.xlane.f32.xlu0 %v1606
  %v1608 = vpop.xlane.xlu0 %1607
  %v1609 = vsel %vm39, %v1592, 0.0
  %1610 = vadd.xlane.f32.xlu0 %v1609
  %v1611 = vpop.xlane.xlu0 %1610
  %v1612 = vsel %vm39, %v1594, 0.0
  %1613 = vadd.xlane.f32.xlu0 %v1612
  %v1614 = vpop.xlane.xlu0 %1613
  %v1615 = vsel %vm39, %v1596, 0.0
  %1616 = vadd.xlane.f32.xlu0 %v1615
  %v1617 = vpop.xlane.xlu0 %1616
  %v1618 = vsel %vm39, %v1598, 0.0
  %1619 = vadd.xlane.f32.xlu0 %v1618
  %v1620 = vpop.xlane.xlu0 %1619
  %v1621 = vsel %vm39, %v1600, 0.0
  %1622 = vadd.xlane.f32.xlu0 %v1621
  %v1623 = vpop.xlane.xlu0 %1622
  %v1624 = vsel %vm39, %v1602, 0.0
  %1625 = vadd.xlane.f32.xlu0 %v1624
  %v1626 = vpop.xlane.xlu0 %1625
  %v1627 = vrcp.pop %v1605
  %v1628 = vrcp.pop %v1608
  %v1629 = vrcp.pop %v1611
  %v1630 = vrcp.pop %v1614
  %v1631 = vrcp.pop %v1617
  %v1632 = vrcp.pop %v1620
  %v1633 = vrcp.pop %v1623
  %v1634 = vrcp.pop %v1626
  %v1635 = vmul.f32 %v1588, %v1627
  %v1636 = vmul.f32 %v1590, %v1628
  %v1637 = vmul.f32 %v1592, %v1629
  %v1638 = vmul.f32 %v1594, %v1630
  %v1639 = vmul.f32 %v1596, %v1631
  %v1640 = vmul.f32 %v1598, %v1632
  %v1641 = vmul.f32 %v1600, %v1633
  %v1642 = vmul.f32 %v1602, %v1634
  %1643 = vrot.lane.b32.xlu0 %v210, 112
  %v1644 = vpop.permute.xlu0 %1643
  %v1645 = vsel %vm39, %v1644, 0
  %v1648 = vsel %vm39, %v1635, 0
  %v1651 = vsel %vm39, %v1636, 0
  %1653 = vmatprep.subr.mxu0 0.0
  %1654 = vmatpush1.xpose.msra.mxu0 %v1648
  %1655 = vmatprep.subr.mxu0 0.0
  %1656 = vmatpush1.xpose.msra.mxu0 %v1651
  %1657 = vmatprep.subr.mxu0 0.0
  %1658 = vmatpush1.xpose.msra.mxu0 0.0
  %1659 = vmatprep.subr.mxu0 0.0
  %1660 = vmatpush1.xpose.msra.mxu0 0.0
  %1661 = vmatprep.subr.mxu0 0.0
  %1662 = vmatpush1.xpose.msra.mxu0 0.0
  %1663 = vmatprep.subr.mxu0 0.0
  %1664 = vmatpush1.xpose.msra.mxu0 0.0
  %1665 = vmatprep.subr.mxu0 0.0
  %1666 = vmatpush1.xpose.msra.mxu0 0.0
  %1667 = vmatprep.subr.mxu0 0.0
  %1668 = vmatpush1.xpose.msra.mxu0 0.0
  %1669 = vmatprep.subr.mxu0 0.0
  %1670 = vmatpush1.xpose.msra.mxu0 0.0
  %1671 = vmatprep.subr.mxu0 0.0
  %1672 = vmatpush1.xpose.msra.mxu0 0.0
  %1673 = vmatprep.subr.mxu0 0.0
  %1674 = vmatpush1.xpose.msra.mxu0 0.0
  %1675 = vmatprep.subr.mxu0 0.0
  %1676 = vmatpush1.xpose.msra.mxu0 0.0
  %1677 = vmatprep.subr.mxu0 0.0
  %1678 = vmatpush1.xpose.msra.mxu0 0.0
  %1679 = vmatprep.subr.mxu0 0.0
  %1680 = vmatpush1.xpose.msra.mxu0 0.0
  %1681 = vmatprep.subr.mxu0 0.0
  %1682 = vmatpush1.xpose.msra.mxu0 0.0
  %1683 = vmatprep.subr.mxu0 0.0
  %1684 = vmatpush1.xpose.msra.mxu0 0.0
  %1685 = vmatprep.subr.mxu0 0.0
  %1686 = vmatpush1.xpose.msra.mxu0 0.0
  %1687 = vmatprep.subr.mxu0 0.0
  %1688 = vmatpush1.xpose.msra.mxu0 0.0
  %1689 = vmatprep.subr.mxu0 0.0
  %1690 = vmatpush1.xpose.msra.mxu0 0.0
  %1691 = vmatprep.subr.mxu0 0.0
  %1692 = vmatpush1.xpose.msra.mxu0 0.0
  %1693 = vmatprep.subr.mxu0 0.0
  %1694 = vmatpush1.xpose.msra.mxu0 0.0
  %1695 = vmatprep.subr.mxu0 0.0
  %1696 = vmatpush1.xpose.msra.mxu0 0.0
  %1697 = vmatprep.subr.mxu0 0.0
  %1698 = vmatpush1.xpose.msra.mxu0 0.0
  %1699 = vmatprep.subr.mxu0 0.0
  %1700 = vmatpush1.xpose.msra.mxu0 0.0
  %1701 = vmatprep.subr.mxu0 0.0
  %1702 = vmatpush1.xpose.msra.mxu0 0.0
  %1703 = vmatprep.subr.mxu0 0.0
  %1704 = vmatpush1.xpose.msra.mxu0 0.0
  %1705 = vmatprep.subr.mxu0 0.0
  %1706 = vmatpush1.xpose.msra.mxu0 0.0
  %1707 = vmatprep.subr.mxu0 0.0
  %1708 = vmatpush1.xpose.msra.mxu0 0.0
  %1709 = vmatprep.subr.mxu0 0.0
  %1710 = vmatpush1.xpose.msra.mxu0 0.0
  %1711 = vmatprep.subr.mxu0 0.0
  %1712 = vmatpush1.xpose.msra.mxu0 0.0
  %1713 = vmatprep.subr.mxu0 0.0
  %1714 = vmatpush1.xpose.msra.mxu0 0.0
  %1715 = vmatprep.subr.mxu0 0.0
  %1716 = vmatpush1.xpose.msra.mxu0 0.0
  %1717 = vmatprep.mubr.f32.mxu0 0.0
  %1718 = vmatmul.mubr.f32.gmra.mrb[0].mxu0 %v1645
  %v1719 = vpop.f32.mrb[0].mxu0
  %v1720 = vadd.f32 0.0, %v1719
  %v1721 = vpop.f32.mrb[0].mxu0
  %1722 = vdwg.mxu0
  %1723 = vrot.lane.b32.xlu0 %v211, 112
  %v1724 = vpop.permute.xlu0 %1723
  %v1725 = vsel %vm39, %v1724, 0
  %v1728 = vsel %vm39, %v1637, 0
  %v1731 = vsel %vm39, %v1638, 0
  %1733 = vmatprep.subr.mxu0 0.0
  %1734 = vmatpush1.xpose.msra.mxu0 %v1728
  %1735 = vmatprep.subr.mxu0 0.0
  %1736 = vmatpush1.xpose.msra.mxu0 %v1731
  %1737 = vmatprep.subr.mxu0 0.0
  %1738 = vmatpush1.xpose.msra.mxu0 0.0
  %1739 = vmatprep.subr.mxu0 0.0
  %1740 = vmatpush1.xpose.msra.mxu0 0.0
  %1741 = vmatprep.subr.mxu0 0.0
  %1742 = vmatpush1.xpose.msra.mxu0 0.0
  %1743 = vmatprep.subr.mxu0 0.0
  %1744 = vmatpush1.xpose.msra.mxu0 0.0
  %1745 = vmatprep.subr.mxu0 0.0
  %1746 = vmatpush1.xpose.msra.mxu0 0.0
  %1747 = vmatprep.subr.mxu0 0.0
  %1748 = vmatpush1.xpose.msra.mxu0 0.0
  %1749 = vmatprep.subr.mxu0 0.0
  %1750 = vmatpush1.xpose.msra.mxu0 0.0
  %1751 = vmatprep.subr.mxu0 0.0
  %1752 = vmatpush1.xpose.msra.mxu0 0.0
  %1753 = vmatprep.subr.mxu0 0.0
  %1754 = vmatpush1.xpose.msra.mxu0 0.0
  %1755 = vmatprep.subr.mxu0 0.0
  %1756 = vmatpush1.xpose.msra.mxu0 0.0
  %1757 = vmatprep.subr.mxu0 0.0
  %1758 = vmatpush1.xpose.msra.mxu0 0.0
  %1759 = vmatprep.subr.mxu0 0.0
  %1760 = vmatpush1.xpose.msra.mxu0 0.0
  %1761 = vmatprep.subr.mxu0 0.0
  %1762 = vmatpush1.xpose.msra.mxu0 0.0
  %1763 = vmatprep.subr.mxu0 0.0
  %1764 = vmatpush1.xpose.msra.mxu0 0.0
  %1765 = vmatprep.subr.mxu0 0.0
  %1766 = vmatpush1.xpose.msra.mxu0 0.0
  %1767 = vmatprep.subr.mxu0 0.0
  %1768 = vmatpush1.xpose.msra.mxu0 0.0
  %1769 = vmatprep.subr.mxu0 0.0
  %1770 = vmatpush1.xpose.msra.mxu0 0.0
  %1771 = vmatprep.subr.mxu0 0.0
  %1772 = vmatpush1.xpose.msra.mxu0 0.0
  %1773 = vmatprep.subr.mxu0 0.0
  %1774 = vmatpush1.xpose.msra.mxu0 0.0
  %1775 = vmatprep.subr.mxu0 0.0
  %1776 = vmatpush1.xpose.msra.mxu0 0.0
  %1777 = vmatprep.subr.mxu0 0.0
  %1778 = vmatpush1.xpose.msra.mxu0 0.0
  %1779 = vmatprep.subr.mxu0 0.0
  %1780 = vmatpush1.xpose.msra.mxu0 0.0
  %1781 = vmatprep.subr.mxu0 0.0
  %1782 = vmatpush1.xpose.msra.mxu0 0.0
  %1783 = vmatprep.subr.mxu0 0.0
  %1784 = vmatpush1.xpose.msra.mxu0 0.0
  %1785 = vmatprep.subr.mxu0 0.0
  %1786 = vmatpush1.xpose.msra.mxu0 0.0
  %1787 = vmatprep.subr.mxu0 0.0
  %1788 = vmatpush1.xpose.msra.mxu0 0.0
  %1789 = vmatprep.subr.mxu0 0.0
  %1790 = vmatpush1.xpose.msra.mxu0 0.0
  %1791 = vmatprep.subr.mxu0 0.0
  %1792 = vmatpush1.xpose.msra.mxu0 0.0
  %1793 = vmatprep.subr.mxu0 0.0
  %1794 = vmatpush1.xpose.msra.mxu0 0.0
  %1795 = vmatprep.subr.mxu0 0.0
  %1796 = vmatpush1.xpose.msra.mxu0 0.0
  %1797 = vmatprep.mubr.f32.mxu0 0.0
  %1798 = vmatmul.mubr.f32.gmra.mrb[0].mxu0 %v1725
  %v1799 = vpop.f32.mrb[0].mxu0
  %v1800 = vadd.f32 0.0, %v1799
  %v1801 = vpop.f32.mrb[0].mxu0
  %1802 = vdwg.mxu0
  %1803 = vrot.lane.b32.xlu0 %v212, 112
  %v1804 = vpop.permute.xlu0 %1803
  %v1805 = vsel %vm39, %v1804, 0
  %v1808 = vsel %vm39, %v1639, 0
  %v1811 = vsel %vm39, %v1640, 0
  %1813 = vmatprep.subr.mxu0 0.0
  %1814 = vmatpush1.xpose.msra.mxu0 %v1808
  %1815 = vmatprep.subr.mxu0 0.0
  %1816 = vmatpush1.xpose.msra.mxu0 %v1811
  %1817 = vmatprep.subr.mxu0 0.0
  %1818 = vmatpush1.xpose.msra.mxu0 0.0
  %1819 = vmatprep.subr.mxu0 0.0
  %1820 = vmatpush1.xpose.msra.mxu0 0.0
  %1821 = vmatprep.subr.mxu0 0.0
  %1822 = vmatpush1.xpose.msra.mxu0 0.0
  %1823 = vmatprep.subr.mxu0 0.0
  %1824 = vmatpush1.xpose.msra.mxu0 0.0
  %1825 = vmatprep.subr.mxu0 0.0
  %1826 = vmatpush1.xpose.msra.mxu0 0.0
  %1827 = vmatprep.subr.mxu0 0.0
  %1828 = vmatpush1.xpose.msra.mxu0 0.0
  %1829 = vmatprep.subr.mxu0 0.0
  %1830 = vmatpush1.xpose.msra.mxu0 0.0
  %1831 = vmatprep.subr.mxu0 0.0
  %1832 = vmatpush1.xpose.msra.mxu0 0.0
  %1833 = vmatprep.subr.mxu0 0.0
  %1834 = vmatpush1.xpose.msra.mxu0 0.0
  %1835 = vmatprep.subr.mxu0 0.0
  %1836 = vmatpush1.xpose.msra.mxu0 0.0
  %1837 = vmatprep.subr.mxu0 0.0
  %1838 = vmatpush1.xpose.msra.mxu0 0.0
  %1839 = vmatprep.subr.mxu0 0.0
  %1840 = vmatpush1.xpose.msra.mxu0 0.0
  %1841 = vmatprep.subr.mxu0 0.0
  %1842 = vmatpush1.xpose.msra.mxu0 0.0
  %1843 = vmatprep.subr.mxu0 0.0
  %1844 = vmatpush1.xpose.msra.mxu0 0.0
  %1845 = vmatprep.subr.mxu0 0.0
  %1846 = vmatpush1.xpose.msra.mxu0 0.0
  %1847 = vmatprep.subr.mxu0 0.0
  %1848 = vmatpush1.xpose.msra.mxu0 0.0
  %1849 = vmatprep.subr.mxu0 0.0
  %1850 = vmatpush1.xpose.msra.mxu0 0.0
  %1851 = vmatprep.subr.mxu0 0.0
  %1852 = vmatpush1.xpose.msra.mxu0 0.0
  %1853 = vmatprep.subr.mxu0 0.0
  %1854 = vmatpush1.xpose.msra.mxu0 0.0
  %1855 = vmatprep.subr.mxu0 0.0
  %1856 = vmatpush1.xpose.msra.mxu0 0.0
  %1857 = vmatprep.subr.mxu0 0.0
  %1858 = vmatpush1.xpose.msra.mxu0 0.0
  %1859 = vmatprep.subr.mxu0 0.0
  %1860 = vmatpush1.xpose.msra.mxu0 0.0
  %1861 = vmatprep.subr.mxu0 0.0
  %1862 = vmatpush1.xpose.msra.mxu0 0.0
  %1863 = vmatprep.subr.mxu0 0.0
  %1864 = vmatpush1.xpose.msra.mxu0 0.0
  %1865 = vmatprep.subr.mxu0 0.0
  %1866 = vmatpush1.xpose.msra.mxu0 0.0
  %1867 = vmatprep.subr.mxu0 0.0
  %1868 = vmatpush1.xpose.msra.mxu0 0.0
  %1869 = vmatprep.subr.mxu0 0.0
  %1870 = vmatpush1.xpose.msra.mxu0 0.0
  %1871 = vmatprep.subr.mxu0 0.0
  %1872 = vmatpush1.xpose.msra.mxu0 0.0
  %1873 = vmatprep.subr.mxu0 0.0
  %1874 = vmatpush1.xpose.msra.mxu0 0.0
  %1875 = vmatprep.subr.mxu0 0.0
  %1876 = vmatpush1.xpose.msra.mxu0 0.0
  %1877 = vmatprep.mubr.f32.mxu0 0.0
  %1878 = vmatmul.mubr.f32.gmra.mrb[0].mxu0 %v1805
  %v1879 = vpop.f32.mrb[0].mxu0
  %v1880 = vadd.f32 0.0, %v1879
  %v1881 = vpop.f32.mrb[0].mxu0
  %1882 = vdwg.mxu0
  %1883 = vrot.lane.b32.xlu0 %v213, 112
  %v1884 = vpop.permute.xlu0 %1883
  %v1885 = vsel %vm39, %v1884, 0
  %v1888 = vsel %vm39, %v1641, 0
  %v1891 = vsel %vm39, %v1642, 0
  %1893 = vmatprep.subr.mxu0 0.0
  %1894 = vmatpush1.xpose.msra.mxu0 %v1888
  %1895 = vmatprep.subr.mxu0 0.0
  %1896 = vmatpush1.xpose.msra.mxu0 %v1891
  %1897 = vmatprep.subr.mxu0 0.0
  %1898 = vmatpush1.xpose.msra.mxu0 0.0
  %1899 = vmatprep.subr.mxu0 0.0
  %1900 = vmatpush1.xpose.msra.mxu0 0.0
  %1901 = vmatprep.subr.mxu0 0.0
  %1902 = vmatpush1.xpose.msra.mxu0 0.0
  %1903 = vmatprep.subr.mxu0 0.0
  %1904 = vmatpush1.xpose.msra.mxu0 0.0
  %1905 = vmatprep.subr.mxu0 0.0
  %1906 = vmatpush1.xpose.msra.mxu0 0.0
  %1907 = vmatprep.subr.mxu0 0.0
  %1908 = vmatpush1.xpose.msra.mxu0 0.0
  %1909 = vmatprep.subr.mxu0 0.0
  %1910 = vmatpush1.xpose.msra.mxu0 0.0
  %1911 = vmatprep.subr.mxu0 0.0
  %1912 = vmatpush1.xpose.msra.mxu0 0.0
  %1913 = vmatprep.subr.mxu0 0.0
  %1914 = vmatpush1.xpose.msra.mxu0 0.0
  %1915 = vmatprep.subr.mxu0 0.0
  %1916 = vmatpush1.xpose.msra.mxu0 0.0
  %1917 = vmatprep.subr.mxu0 0.0
  %1918 = vmatpush1.xpose.msra.mxu0 0.0
  %1919 = vmatprep.subr.mxu0 0.0
  %1920 = vmatpush1.xpose.msra.mxu0 0.0
  %1921 = vmatprep.subr.mxu0 0.0
  %1922 = vmatpush1.xpose.msra.mxu0 0.0
  %1923 = vmatprep.subr.mxu0 0.0
  %1924 = vmatpush1.xpose.msra.mxu0 0.0
  %1925 = vmatprep.subr.mxu0 0.0
  %1926 = vmatpush1.xpose.msra.mxu0 0.0
  %1927 = vmatprep.subr.mxu0 0.0
  %1928 = vmatpush1.xpose.msra.mxu0 0.0
  %1929 = vmatprep.subr.mxu0 0.0
  %1930 = vmatpush1.xpose.msra.mxu0 0.0
  %1931 = vmatprep.subr.mxu0 0.0
  %1932 = vmatpush1.xpose.msra.mxu0 0.0
  %1933 = vmatprep.subr.mxu0 0.0
  %1934 = vmatpush1.xpose.msra.mxu0 0.0
  %1935 = vmatprep.subr.mxu0 0.0
  %1936 = vmatpush1.xpose.msra.mxu0 0.0
  %1937 = vmatprep.subr.mxu0 0.0
  %1938 = vmatpush1.xpose.msra.mxu0 0.0
  %1939 = vmatprep.subr.mxu0 0.0
  %1940 = vmatpush1.xpose.msra.mxu0 0.0
  %1941 = vmatprep.subr.mxu0 0.0
  %1942 = vmatpush1.xpose.msra.mxu0 0.0
  %1943 = vmatprep.subr.mxu0 0.0
  %1944 = vmatpush1.xpose.msra.mxu0 0.0
  %1945 = vmatprep.subr.mxu0 0.0
  %1946 = vmatpush1.xpose.msra.mxu0 0.0
  %1947 = vmatprep.subr.mxu0 0.0
  %1948 = vmatpush1.xpose.msra.mxu0 0.0
  %1949 = vmatprep.subr.mxu0 0.0
  %1950 = vmatpush1.xpose.msra.mxu0 0.0
  %1951 = vmatprep.subr.mxu0 0.0
  %1952 = vmatpush1.xpose.msra.mxu0 0.0
  %1953 = vmatprep.subr.mxu0 0.0
  %1954 = vmatpush1.xpose.msra.mxu0 0.0
  %1955 = vmatprep.subr.mxu0 0.0
  %1956 = vmatpush1.xpose.msra.mxu0 0.0
  %1957 = vmatprep.mubr.f32.mxu0 0.0
  %1958 = vmatmul.mubr.f32.gmra.mrb[0].mxu0 %v1885
  %v1959 = vpop.f32.mrb[0].mxu0
  %v1960 = vadd.f32 0.0, %v1959
  %v1961 = vpop.f32.mrb[0].mxu0
  %1962 = vdwg.mxu0
  %1967 = vrot.lane.b32.xlu0 %v1720, 16
  %v1968 = vpop.permute.xlu0 %1967
  %1969 = vrot.lane.b32.xlu0 %v1800, 16
  %v1970 = vpop.permute.xlu0 %1969
  %1971 = vrot.lane.b32.xlu0 %v1880, 16
  %v1972 = vpop.permute.xlu0 %1971
  %1973 = vrot.lane.b32.xlu0 %v1960, 16
  %v1974 = vpop.permute.xlu0 %1973
  %v1979 = vsel %vm39, %v839, %v1968
  %v1980 = vsel %vm39, %v918, %v1970
  %v1981 = vsel %vm39, %v997, %v1972
  %v1982 = vsel %vm39, %v1076, %v1974
  %v1983 = vcombine.low %v1979, %v1981
  %v1984 = vcombine.high %v1979, %v1981
  %v1986 = vunpack.c.l.s4 1983009808
  %v1987 = vunpack.c.0.s8 %v1986
  %v1988 = vlaneseq
  %v1989 = vshrl.u32 %v1988, 7
  %v1990 = vsub.s32 %v1987, %v1989
  %v1991 = vrot.slane %v1983, %v1990
  %v1993 = vunpack.c.l.s4 1983009808
  %v1994 = vunpack.c.0.s8 %v1993
  %v1995 = vlaneseq
  %v1996 = vshrl.u32 %v1995, 7
  %v1997 = vsub.s32 %v1994, %v1996
  %v1998 = vrot.slane %v1984, %v1997
  %v1999 = vcombine.low %v1980, %v1982
  %v2000 = vcombine.high %v1980, %v1982
  %v2002 = vunpack.c.l.s4 1983009808
  %v2003 = vunpack.c.0.s8 %v2002
  %v2004 = vlaneseq
  %v2005 = vshrl.u32 %v2004, 7
  %v2006 = vsub.s32 %v2003, %v2005
  %v2007 = vrot.slane %v1999, %v2006
  %v2009 = vunpack.c.l.s4 1983009808
  %v2010 = vunpack.c.0.s8 %v2009
  %v2011 = vlaneseq
  %v2012 = vshrl.u32 %v2011, 7
  %v2013 = vsub.s32 %v2010, %v2012
  %v2014 = vrot.slane %v2000, %v2013
  %v2015 = vcombine.low %v1991, %v2007
  %v2016 = vcombine.high %v1991, %v2007
  %v2018 = vunpack.c.l.s4 1934713408
  %v2019 = vunpack.c.0.s8 %v2018
  %v2020 = vlaneseq
  %v2021 = vshrl.u32 %v2020, 7
  %v2022 = vsub.s32 %v2019, %v2021
  %v2023 = vrot.slane %v2015, %v2022
  %v2025 = vunpack.c.l.s4 1934713408
  %v2026 = vunpack.c.0.s8 %v2025
  %v2027 = vlaneseq
  %v2028 = vshrl.u32 %v2027, 7
  %v2029 = vsub.s32 %v2026, %v2028
  %v2030 = vrot.slane %v2016, %v2029
  %v2031 = vcombine.low %v1998, %v2014
  %v2032 = vcombine.high %v1998, %v2014
  %v2034 = vunpack.c.l.s4 1934713408
  %v2035 = vunpack.c.0.s8 %v2034
  %v2036 = vlaneseq
  %v2037 = vshrl.u32 %v2036, 7
  %v2038 = vsub.s32 %v2035, %v2037
  %v2039 = vrot.slane %v2031, %v2038
  %v2041 = vunpack.c.l.s4 1934713408
  %v2042 = vunpack.c.0.s8 %v2041
  %v2043 = vlaneseq
  %v2044 = vshrl.u32 %v2043, 7
  %v2045 = vsub.s32 %v2042, %v2044
  %v2046 = vrot.slane %v2032, %v2045
  %v2047 = vcombine.high %v2023, 0.0
  %v2048 = vcombine.high %v2030, 0.0
  %v2049 = vcombine.high %v2039, 0.0
  %v2050 = vcombine.high %v2046, 0.0
  %v2059 = vcombine.low %v2023, %v2047
  %v2060 = vcombine.low %v2030, %v2048
  %v2061 = vcombine.low %v2039, %v2049
  %v2062 = vcombine.low %v2046, %v2050
  %v2067 = vadd.f32 %v40, %v2059
  %v2068 = vadd.f32 %v41, %v2060
  %v2069 = vadd.f32 %v42, %v2061
  %v2070 = vadd.f32 %v43, %v2062
  %v2071 = vsel %vm60, %v2067, 0.0
  %2072 = vadd.xlane.f32.xlu0 %v2071
  %v2073 = vpop.xlane.xlu0 %2072
  %v2074 = vsel %vm60, %v2068, 0.0
  %2075 = vadd.xlane.f32.xlu0 %v2074
  %v2076 = vpop.xlane.xlu0 %2075
  %v2077 = vsel %vm60, %v2069, 0.0
  %2078 = vadd.xlane.f32.xlu0 %v2077
  %v2079 = vpop.xlane.xlu0 %2078
  %v2080 = vsel %vm60, %v2070, 0.0
  %2081 = vadd.xlane.f32.xlu0 %v2080
  %v2082 = vpop.xlane.xlu0 %2081
  %v2083 = vrcp.pop 32.0
  %v2084 = vmul.f32 %v2073, %v2083
  %v2085 = vmul.f32 %v2076, %v2083
  %v2086 = vmul.f32 %v2079, %v2083
  %v2087 = vmul.f32 %v2082, %v2083
  %v2088 = vsub.f32 %v2067, %v2084
  %v2089 = vsub.f32 %v2068, %v2085
  %v2090 = vsub.f32 %v2069, %v2086
  %v2091 = vsub.f32 %v2070, %v2087
  %v2092 = vmul.f32 %v2088, %v2088
  %v2093 = vmul.f32 %v2089, %v2089
  %v2094 = vmul.f32 %v2090, %v2090
  %v2095 = vmul.f32 %v2091, %v2091
  %v2096 = vsel %vm60, %v2092, 0.0
  %2097 = vadd.xlane.f32.xlu0 %v2096
  %v2098 = vpop.xlane.xlu0 %2097
  %v2099 = vsel %vm60, %v2093, 0.0
  %2100 = vadd.xlane.f32.xlu0 %v2099
  %v2101 = vpop.xlane.xlu0 %2100
  %v2102 = vsel %vm60, %v2094, 0.0
  %2103 = vadd.xlane.f32.xlu0 %v2102
  %v2104 = vpop.xlane.xlu0 %2103
  %v2105 = vsel %vm60, %v2095, 0.0
  %2106 = vadd.xlane.f32.xlu0 %v2105
  %v2107 = vpop.xlane.xlu0 %2106
  %v2108 = vmul.f32 %v2098, %v2083
  %v2109 = vmul.f32 %v2101, %v2083
  %v2110 = vmul.f32 %v2104, %v2083
  %v2111 = vmul.f32 %v2107, %v2083
  %v2112 = vadd.f32 %v2108, 1e-05
  %v2113 = vadd.f32 %v2109, 1e-05
  %v2114 = vadd.f32 %v2110, 1e-05
  %v2115 = vadd.f32 %v2111, 1e-05
  %v2116 = vrsqrt.pop %v2112
  %v2117 = vrsqrt.pop %v2113
  %v2118 = vrsqrt.pop %v2114
  %v2119 = vrsqrt.pop %v2115
  %v2120 = vmul.f32 %v2088, %v2116
  %v2121 = vmul.f32 %v2089, %v2117
  %v2122 = vmul.f32 %v2090, %v2118
  %v2123 = vmul.f32 %v2091, %v2119
  %2124 = vset.pattern.permute.xlu0 2
  %2125 = vperm.xlu0 %2124, %v56
  %v2126 = vpop.permute.xlu0 %2125
  %2128 = vset.pattern.permute.xlu0 2
  %2129 = vperm.xlu0 %2128, %v57
  %v2130 = vpop.permute.xlu0 %2129
  %2132 = vset.pattern.permute.xlu0 2
  %2133 = vperm.xlu0 %2132, %v58
  %v2134 = vpop.permute.xlu0 %2133
  %2136 = vset.pattern.permute.xlu0 2
  %2137 = vperm.xlu0 %2136, %v59
  %v2138 = vpop.permute.xlu0 %2137
  %v2140 = vmul.f32 %v2120, %v2126
  %v2141 = vmul.f32 %v2121, %v2130
  %v2142 = vmul.f32 %v2122, %v2134
  %v2143 = vmul.f32 %v2123, %v2138
  %2144 = vset.pattern.permute.xlu0 3
  %2145 = vperm.xlu0 %2144, %v56
  %v2146 = vpop.permute.xlu0 %2145
  %2148 = vset.pattern.permute.xlu0 3
  %2149 = vperm.xlu0 %2148, %v57
  %v2150 = vpop.permute.xlu0 %2149
  %2152 = vset.pattern.permute.xlu0 3
  %2153 = vperm.xlu0 %2152, %v58
  %v2154 = vpop.permute.xlu0 %2153
  %2156 = vset.pattern.permute.xlu0 3
  %2157 = vperm.xlu0 %2156, %v59
  %v2158 = vpop.permute.xlu0 %2157
  %v2160 = vadd.f32 %v2140, %v2146
  %v2161 = vadd.f32 %v2141, %v2150
  %v2162 = vadd.f32 %v2142, %v2154
  %v2163 = vadd.f32 %v2143, %v2158
  %2164 = vset.pattern.permute.xlu0 1
  %2165 = vperm.xlu0 %2164, %v56
  %v2166 = vpop.permute.xlu0 %2165
  %2168 = vset.pattern.permute.xlu0 1
  %2169 = vperm.xlu0 %2168, %v57
  %v2170 = vpop.permute.xlu0 %2169
  %2172 = vset.pattern.permute.xlu0 1
  %2173 = vperm.xlu0 %2172, %v58
  %v2174 = vpop.permute.xlu0 %2173
  %2176 = vset.pattern.permute.xlu0 1
  %2177 = vperm.xlu0 %2176, %v59
  %v2178 = vpop.permute.xlu0 %2177
  %v2181 = vsel %vm60, %v52, 0
  %v2184 = vsel %vm60, %v53, 0
  %v2187 = vsel %vm60, %v54, 0
  %v2190 = vsel %vm60, %v55, 0
  %2192 = vmatprep.subr.mxu0 0.0
  %2193 = vmatpush1.msra.mxu0 %v2160
  %2194 = vmatprep.subr.mxu0 0.0
  %2195 = vmatpush1.msra.mxu0 %v2161
  %2196 = vmatprep.subr.mxu0 0.0
  %2197 = vmatpush1.msra.mxu0 %v2162
  %2198 = vmatprep.subr.mxu0 0.0
  %2199 = vmatpush1.msra.mxu0 %v2163
  %2200 = vmatprep.subr.mxu0 0.0
  %2201 = vmatpush1.msra.mxu0 0.0
  %2202 = vmatprep.subr.mxu0 0.0
  %2203 = vmatpush1.msra.mxu0 0.0
  %2204 = vmatprep.subr.mxu0 0.0
  %2205 = vmatpush1.msra.mxu0 0.0
  %2206 = vmatprep.subr.mxu0 0.0
  %2207 = vmatpush1.msra.mxu0 0.0
  %2208 = vmatprep.subr.mxu0 0.0
  %2209 = vmatpush1.msra.mxu0 0.0
  %2210 = vmatprep.subr.mxu0 0.0
  %2211 = vmatpush1.msra.mxu0 0.0
  %2212 = vmatprep.subr.mxu0 0.0
  %2213 = vmatpush1.msra.mxu0 0.0
  %2214 = vmatprep.subr.mxu0 0.0
  %2215 = vmatpush1.msra.mxu0 0.0
  %2216 = vmatprep.subr.mxu0 0.0
  %2217 = vmatpush1.msra.mxu0 0.0
  %2218 = vmatprep.subr.mxu0 0.0
  %2219 = vmatpush1.msra.mxu0 0.0
  %2220 = vmatprep.subr.mxu0 0.0
  %2221 = vmatpush1.msra.mxu0 0.0
  %2222 = vmatprep.subr.mxu0 0.0
  %2223 = vmatpush1.msra.mxu0 0.0
  %2224 = vmatprep.subr.mxu0 0.0
  %2225 = vmatpush1.msra.mxu0 0.0
  %2226 = vmatprep.subr.mxu0 0.0
  %2227 = vmatpush1.msra.mxu0 0.0
  %2228 = vmatprep.subr.mxu0 0.0
  %2229 = vmatpush1.msra.mxu0 0.0
  %2230 = vmatprep.subr.mxu0 0.0
  %2231 = vmatpush1.msra.mxu0 0.0
  %2232 = vmatprep.subr.mxu0 0.0
  %2233 = vmatpush1.msra.mxu0 0.0
  %2234 = vmatprep.subr.mxu0 0.0
  %2235 = vmatpush1.msra.mxu0 0.0
  %2236 = vmatprep.subr.mxu0 0.0
  %2237 = vmatpush1.msra.mxu0 0.0
  %2238 = vmatprep.subr.mxu0 0.0
  %2239 = vmatpush1.msra.mxu0 0.0
  %2240 = vmatprep.subr.mxu0 0.0
  %2241 = vmatpush1.msra.mxu0 0.0
  %2242 = vmatprep.subr.mxu0 0.0
  %2243 = vmatpush1.msra.mxu0 0.0
  %2244 = vmatprep.subr.mxu0 0.0
  %2245 = vmatpush1.msra.mxu0 0.0
  %2246 = vmatprep.subr.mxu0 0.0
  %2247 = vmatpush1.msra.mxu0 0.0
  %2248 = vmatprep.subr.mxu0 0.0
  %2249 = vmatpush1.msra.mxu0 0.0
  %2250 = vmatprep.subr.mxu0 0.0
  %2251 = vmatpush1.msra.mxu0 0.0
  %2252 = vmatprep.subr.mxu0 0.0
  %2253 = vmatpush1.msra.mxu0 0.0
  %2254 = vmatprep.subr.mxu0 0.0
  %2255 = vmatpush1.msra.mxu0 0.0
  %2256 = vmatprep.mubr.f32.mxu0 0.0
  %2257 = vmatmul.mubr.f32.gmra.mrb[0].mxu0 %v2181
  %v2258 = vpop.f32.mrb[0].mxu0
  %v2259 = vadd.f32 %v2166, %v2258
  %v2260 = vpop.f32.mrb[0].mxu0
  %2261 = vmatprep.mubr.f32.mxu0 0.0
  %2262 = vmatmul.mubr.f32.gmra.mrb[0].mxu0 %v2184
  %v2263 = vpop.f32.mrb[0].mxu0
  %v2264 = vadd.f32 %v2170, %v2263
  %v2265 = vpop.f32.mrb[0].mxu0
  %2266 = vmatprep.mubr.f32.mxu0 0.0
  %2267 = vmatmul.mubr.f32.gmra.mrb[0].mxu0 %v2187
  %v2268 = vpop.f32.mrb[0].mxu0
  %v2269 = vadd.f32 %v2174, %v2268
  %v2270 = vpop.f32.mrb[0].mxu0
  %2271 = vmatprep.mubr.f32.mxu0 0.0
  %2272 = vmatmul.mubr.f32.gmra.mrb[0].mxu0 %v2190
  %v2273 = vpop.f32.mrb[0].mxu0
  %v2274 = vadd.f32 %v2178, %v2273
  %v2275 = vpop.f32.mrb[0].mxu0
  %2276 = vdwg.mxu0
  %v2277 = vadd.f32 %v2160, %v2259
  %v2278 = vadd.f32 %v2161, %v2264
  %v2279 = vadd.f32 %v2162, %v2269
  %v2280 = vadd.f32 %v2163, %v2274
  %v2281 = vsel %vm60, %v2277, 0.0
  %2282 = vadd.xlane.f32.xlu0 %v2281
  %v2283 = vpop.xlane.xlu0 %2282
  %v2284 = vsel %vm60, %v2278, 0.0
  %2285 = vadd.xlane.f32.xlu0 %v2284
  %v2286 = vpop.xlane.xlu0 %2285
  %v2287 = vsel %vm60, %v2279, 0.0
  %2288 = vadd.xlane.f32.xlu0 %v2287
  %v2289 = vpop.xlane.xlu0 %2288
  %v2290 = vsel %vm60, %v2280, 0.0
  %2291 = vadd.xlane.f32.xlu0 %v2290
  %v2292 = vpop.xlane.xlu0 %2291
  %v2293 = vmul.f32 %v2283, %v2083
  %v2294 = vmul.f32 %v2286, %v2083
  %v2295 = vmul.f32 %v2289, %v2083
  %v2296 = vmul.f32 %v2292, %v2083
  %v2297 = vsub.f32 %v2277, %v2293
  %v2298 = vsub.f32 %v2278, %v2294
  %v2299 = vsub.f32 %v2279, %v2295
  %v2300 = vsub.f32 %v2280, %v2296
  %v2301 = vmul.f32 %v2297, %v2297
  %v2302 = vmul.f32 %v2298, %v2298
  %v2303 = vmul.f32 %v2299, %v2299
  %v2304 = vmul.f32 %v2300, %v2300
  %v2305 = vsel %vm60, %v2301, 0.0
  %2306 = vadd.xlane.f32.xlu0 %v2305
  %v2307 = vpop.xlane.xlu0 %2306
  %v2308 = vsel %vm60, %v2302, 0.0
  %2309 = vadd.xlane.f32.xlu0 %v2308
  %v2310 = vpop.xlane.xlu0 %2309
  %v2311 = vsel %vm60, %v2303, 0.0
  %2312 = vadd.xlane.f32.xlu0 %v2311
  %v2313 = vpop.xlane.xlu0 %2312
  %v2314 = vsel %vm60, %v2304, 0.0
  %2315 = vadd.xlane.f32.xlu0 %v2314
  %v2316 = vpop.xlane.xlu0 %2315
  %v2317 = vmul.f32 %v2307, %v2083
  %v2318 = vmul.f32 %v2310, %v2083
  %v2319 = vmul.f32 %v2313, %v2083
  %v2320 = vmul.f32 %v2316, %v2083
  %v2321 = vadd.f32 %v2317, 1e-05
  %v2322 = vadd.f32 %v2318, 1e-05
  %v2323 = vadd.f32 %v2319, 1e-05
  %v2324 = vadd.f32 %v2320, 1e-05
  %v2325 = vrsqrt.pop %v2321
  %v2326 = vrsqrt.pop %v2322
  %v2327 = vrsqrt.pop %v2323
  %v2328 = vrsqrt.pop %v2324
  %v2329 = vmul.f32 %v2297, %v2325
  %v2330 = vmul.f32 %v2298, %v2326
  %v2331 = vmul.f32 %v2299, %v2327
  %v2332 = vmul.f32 %v2300, %v2328
  %2333 = vset.pattern.permute.xlu0 4
  %2334 = vperm.xlu0 %2333, %v56
  %v2335 = vpop.permute.xlu0 %2334
  %2337 = vset.pattern.permute.xlu0 4
  %2338 = vperm.xlu0 %2337, %v57
  %v2339 = vpop.permute.xlu0 %2338
  %2341 = vset.pattern.permute.xlu0 4
  %2342 = vperm.xlu0 %2341, %v58
  %v2343 = vpop.permute.xlu0 %2342
  %2345 = vset.pattern.permute.xlu0 4
  %2346 = vperm.xlu0 %2345, %v59
  %v2347 = vpop.permute.xlu0 %2346
  %v2349 = vmul.f32 %v2329, %v2335
  %v2350 = vmul.f32 %v2330, %v2339
  %v2351 = vmul.f32 %v2331, %v2343
  %v2352 = vmul.f32 %v2332, %v2347
  %2353 = vset.pattern.permute.xlu0 5
  %2354 = vperm.xlu0 %2353, %v56
  %v2355 = vpop.permute.xlu0 %2354
  %2357 = vset.pattern.permute.xlu0 5
  %2358 = vperm.xlu0 %2357, %v57
  %v2359 = vpop.permute.xlu0 %2358
  %2361 = vset.pattern.permute.xlu0 5
  %2362 = vperm.xlu0 %2361, %v58
  %v2363 = vpop.permute.xlu0 %2362
  %2365 = vset.pattern.permute.xlu0 5
  %2366 = vperm.xlu0 %2365, %v59
  %v2367 = vpop.permute.xlu0 %2366
  %v2369 = vadd.f32 %v2349, %v2355
  %v2370 = vadd.f32 %v2350, %v2359
  %v2371 = vadd.f32 %v2351, %v2363
  %v2372 = vadd.f32 %v2352, %v2367
  %2373 = vst.msk [vmem:[%s3] sm:$0xff] %vm39, %v2369
  %2374 = vst.msk [vmem:[%s3 + $0x8] sm:$0xff] %vm39, %v2370
  %2375 = vst.msk [vmem:[%s3 + $0x10] sm:$0xff] %vm39, %v2371
  %2376 = vst.msk [vmem:[%s3 + $0x18] sm:$0xff] %vm39, %v2372
  %2381 = vrot.lane.b32.xlu0 %v2369, 112
  %v2382 = vpop.permute.xlu0 %2381
  %2383 = vrot.lane.b32.xlu0 %v2370, 112
  %v2384 = vpop.permute.xlu0 %2383
  %2385 = vrot.lane.b32.xlu0 %v2371, 112
  %v2386 = vpop.permute.xlu0 %2385
  %2387 = vrot.lane.b32.xlu0 %v2372, 112
  %v2388 = vpop.permute.xlu0 %2387
  %s2393 = scalar_lea.vmem %s3, 32
  %2394 = vst.msk [vmem:[%s2393] sm:$0xff] %vm39, %v2382
  %2395 = vst.msk [vmem:[%s2393 + $0x8] sm:$0xff] %vm39, %v2384
  %2396 = vst.msk [vmem:[%s2393 + $0x10] sm:$0xff] %vm39, %v2386
  %2397 = vst.msk [vmem:[%s2393 + $0x18] sm:$0xff] %vm39, %v2388
  // Predicated region
  $region14: #{tpu_custom_call.1} parent=0 // pred_check
    _
  $region15: #{tpu_custom_call.1} parent=0 // pred_check_branch
    %2399 = sbr.rel (0) target = $region17
  $region16: #{tpu_custom_call.1} parent=0 // pred_region
    _
  $region17: #{tpu_custom_call.1} parent=0 // pred_fallthru
    _
  // Predicated region
  $region18: #{tpu_custom_call.1} parent=0 // pred_check
    _
  $region19: #{tpu_custom_call.1} parent=0 // pred_check_branch
    %2401 = sbr.rel (0) target = $region21
  $region20: #{tpu_custom_call.1} parent=0 // pred_region
    _
  $region21: #{tpu_custom_call.1} parent=0 // pred_fallthru
    _

</llo_original>
